<compile_context>
chip_gen: v5e
topology: v5e:2x2
jax: 0.10.0
libtpu: 0.0.40
codegen_flags: <defaults>
</compile_context>

<pallas_src>
import functools

import jax
import jax.numpy as jnp
from jax.experimental import pallas as pl
from jax.experimental.pallas import tpu as pltpu


# --------------------------------------------------------------------------
# Fused multi-layer recurrent-GN kernel (grid axis = layer index)
# --------------------------------------------------------------------------
def _gn_stack_kernel(node_attr_ref, edge_attr_ref, nh_ref, eh_ref,
                     send_ref, recv_ref, recv_t_ref,
                     wei_ref, weh_ref, bei_ref, beh_ref,
                     wni_ref, wnh_ref, bni_ref, bnh_ref,
                     na_out_ref, ea_out_ref, nh_out_ref, eh_out_ref,
                     *, fn, fe, h):
    li = pl.program_id(0)
    f32 = jnp.float32
    bf16 = jnp.bfloat16

    # Layer-carried graph attrs live in the revisited (VMEM-resident) output
    # blocks: same block index for every li => accumulator pattern, no scratch.
    @pl.when(li == 0)
    def _():
        na_out_ref[...] = node_attr_ref[...].astype(f32)
        ea_out_ref[...] = edge_attr_ref[...].astype(f32)

    na = na_out_ref[...]                # [N, H]  (fn == h)
    ea = ea_out_ref[...]                # [E, H]  (fe == h)
    nh = nh_ref[0]                      # [N, H]  this layer's node hidden
    eh = eh_ref[0]                      # [E, H]  this layer's edge hidden

    # Hoisted bf16 casts (each feeds one or more weight matmuls).
    na_bf = na.astype(bf16)
    ea_bf = ea.astype(bf16)
    nh_bf = nh.astype(bf16)
    eh_bf = eh.astype(bf16)

    def mm_w(a_bf, w):
        # Weight matmul: bf16 operands, f32 accumulation (MXU native rate).
        return jnp.dot(a_bf, w, preferred_element_type=f32)

    def mm_oh(oh, dense):
        # One-hot gather/scatter matmul: f32 operands => exact gather/sum.
        return jnp.dot(oh, dense, preferred_element_type=f32)

    def gru(gx, gh, hidden):
        # torch.nn.GRUCell gate order (r, z, n); h' = (1-z)*n + z*h.
        r = jax.nn.sigmoid(gx[:, :h] + gh[:, :h])
        z = jax.nn.sigmoid(gx[:, h:2 * h] + gh[:, h:2 * h])
        n = jnp.tanh(gx[:, 2 * h:] + r * gh[:, 2 * h:])
        return (1.0 - z) * n + z * hidden

    # ---- Edge GRU:  x_e = [src | dst | edge_attr], hidden = edge_hidden ----
    w_e_i = wei_ref[0]                                 # [2fn+fe, 3h] (src|dst|edge rows)
    # Fold gathers into the input matmul: project node features once, then
    # gather the [N, 3h] projections with the one-hot matrices.
    p_src = mm_w(na_bf, w_e_i[:fn, :])                 # [N, 3h]
    p_dst = mm_w(na_bf, w_e_i[fn:2 * fn, :])           # [N, 3h]
    gx_e = (mm_oh(send_ref[...], p_src)
            + mm_oh(recv_ref[...], p_dst)
            + mm_w(ea_bf, w_e_i[2 * fn:, :])
            + bei_ref[0])                              # [E, 3h]
    gh_e = mm_w(eh_bf, weh_ref[0]) + beh_ref[0]        # [E, 3h]
    new_eh = gru(gx_e, gh_e, eh)                       # [E, h]

    # ---- Scatter-add updated edges onto receiver nodes ---------------------
    agg = mm_oh(recv_t_ref[...], new_eh)               # [N, h]

    # ---- Node GRU:  x_n = [node_attr | agg], hidden = node_hidden ----------
    w_n_i = wni_ref[0]                                 # [fn+h, 3h]
    gx_n = (mm_w(na_bf, w_n_i[:fn, :])
            + mm_w(agg.astype(bf16), w_n_i[fn:, :])
            + bni_ref[0])                              # [N, 3h]
    gh_n = mm_w(nh_bf, wnh_ref[0]) + bnh_ref[0]        # [N, 3h]
    new_nh = gru(gx_n, gh_n, nh)                       # [N, h]

    # ---- Write this layer's hidden slices; attrs carry via the out blocks --
    nh_out_ref[0] = new_nh.astype(nh_out_ref.dtype)
    eh_out_ref[0] = new_eh.astype(eh_out_ref.dtype)
    na_out_ref[...] = new_nh                           # carried to next layer
    ea_out_ref[...] = new_eh


def _cost_estimate(L, N, E, FN, FE, H):
    g = 3 * H
    per_layer_flops = 2 * (
        2 * N * FN * g            # src/dst node projections
        + 2 * E * N * g           # one-hot gathers of projections
        + E * FE * g              # edge_attr input matmul
        + E * H * g               # edge hidden matmul
        + N * E * H               # scatter-add (recv_oh^T @ edges)
        + N * FN * g + N * H * g  # node input matmuls
        + N * H * g               # node hidden matmul
    )
    transcendentals = L * (E + N) * g
    bytes_accessed = (
        4 * (N * FN + E * FE)                                  # initial attrs
        + 4 * 2 * L * (N * H + E * H)                          # hidden stacks in+out
        + 4 * (N * H + E * H)                                  # final attrs out
        + 4 * (2 * E * N + N * E)                              # f32 one-hots
        + 2 * L * ((2 * FN + FE + H) * g + (FN + 2 * H) * g)   # bf16 weights
        + 4 * L * 4 * g                                        # f32 biases
    )
    return pl.CostEstimate(flops=L * per_layer_flops,
                           transcendentals=transcendentals,
                           bytes_accessed=bytes_accessed)


# --------------------------------------------------------------------------
# MultiLayerRecurrentGN.forward
# --------------------------------------------------------------------------
def multi_layer_recurrent_gn(params, node_attr, edge_attr,
                             node_hidden, edge_hidden,
                             send_oh, recv_oh, recv_oh_t):
    L, N, H = node_hidden.shape
    E = edge_hidden.shape[1]
    FN = node_attr.shape[1]
    FE = edge_attr.shape[1]
    # Layer chaining (attrs <- hiddens) needs matching widths (PDGN config).
    assert FN == H and FE == H
    g = 3 * H
    d_e = 2 * FN + FE
    d_n = FN + H

    kernel = functools.partial(_gn_stack_kernel, fn=FN, fe=FE, h=H)

    grid_spec = pltpu.PrefetchScalarGridSpec(
        num_scalar_prefetch=0,
        grid=(L,),
        in_specs=[
            pl.BlockSpec((N, FN), lambda li: (0, 0)),          # node_attr (layer 0 seed)
            pl.BlockSpec((E, FE), lambda li: (0, 0)),          # edge_attr (layer 0 seed)
            pl.BlockSpec((1, N, H), lambda li: (li, 0, 0)),    # node_hidden[li]
            pl.BlockSpec((1, E, H), lambda li: (li, 0, 0)),    # edge_hidden[li]
            pl.BlockSpec((E, N), lambda li: (0, 0)),           # send_oh (f32, resident)
            pl.BlockSpec((E, N), lambda li: (0, 0)),           # recv_oh (f32, resident)
            pl.BlockSpec((N, E), lambda li: (0, 0)),           # recv_oh^T (f32, resident)
            pl.BlockSpec((1, d_e, g), lambda li: (li, 0, 0)),  # W_e_i
            pl.BlockSpec((1, H, g), lambda li: (li, 0, 0)),    # W_e_h
            pl.BlockSpec((1, 1, g), lambda li: (li, 0, 0)),    # b_e_i
            pl.BlockSpec((1, 1, g), lambda li: (li, 0, 0)),    # b_e_h
            pl.BlockSpec((1, d_n, g), lambda li: (li, 0, 0)),  # W_n_i
            pl.BlockSpec((1, H, g), lambda li: (li, 0, 0)),    # W_n_h
            pl.BlockSpec((1, 1, g), lambda li: (li, 0, 0)),    # b_n_i
            pl.BlockSpec((1, 1, g), lambda li: (li, 0, 0)),    # b_n_h
        ],
        out_specs=[
            pl.BlockSpec((N, H), lambda li: (0, 0)),           # final node_attr (carry)
            pl.BlockSpec((E, H), lambda li: (0, 0)),           # final edge_attr (carry)
            pl.BlockSpec((1, N, H), lambda li: (li, 0, 0)),    # node_hidden stack
            pl.BlockSpec((1, E, H), lambda li: (li, 0, 0)),    # edge_hidden stack
        ],
        scratch_shapes=[],
    )

    out_shape = (
        jax.ShapeDtypeStruct((N, H), jnp.float32),
        jax.ShapeDtypeStruct((E, H), jnp.float32),
        jax.ShapeDtypeStruct((L, N, H), jnp.float32),
        jax.ShapeDtypeStruct((L, E, H), jnp.float32),
    )

    return pl.pallas_call(
        kernel,
        out_shape=out_shape,
        grid_spec=grid_spec,
        compiler_params=pltpu.CompilerParams(
            dimension_semantics=("arbitrary",),   # layers are sequential (carry)
        ),
        cost_estimate=_cost_estimate(L, N, E, FN, FE, H),
    )(node_attr, edge_attr, node_hidden, edge_hidden,
      send_oh, recv_oh, recv_oh_t,
      params["w_e_i"], params["w_e_h"], params["b_e_i"], params["b_e_h"],
      params["w_n_i"], params["w_n_h"], params["b_n_i"], params["b_n_h"])


# --------------------------------------------------------------------------
# Deterministic parameter init (fused [din, 3H] / [H, 3H] GRU layout,
# weights bf16, biases f32, stacked over layers)
# --------------------------------------------------------------------------
def init_params(key, num_layers, fn, fe, h):
    d_e = 2 * fn + fe
    d_n = fn + h
    ks = jax.random.split(key, 8)
    scale = 0.1

    def w(k, shape):
        return (scale * jax.random.normal(k, shape, jnp.float32)).astype(jnp.bfloat16)

    def b(k, shape):
        return 0.01 * jax.random.normal(k, shape, jnp.float32)

    return {
        "w_e_i": w(ks[0], (num_layers, d_e, 3 * h)),
        "w_e_h": w(ks[1], (num_layers, h, 3 * h)),
        "b_e_i": b(ks[2], (num_layers, 1, 3 * h)),
        "b_e_h": b(ks[3], (num_layers, 1, 3 * h)),
        "w_n_i": w(ks[4], (num_layers, d_n, 3 * h)),
        "w_n_h": w(ks[5], (num_layers, h, 3 * h)),
        "b_n_i": b(ks[6], (num_layers, 1, 3 * h)),
        "b_n_h": b(ks[7], (num_layers, 1, 3 * h)),
    }


# --------------------------------------------------------------------------
# Pure-JAX reference (same mixed precision) for a correctness check
# --------------------------------------------------------------------------
def reference_forward(params, node_attr, edge_attr, node_hidden, edge_hidden,
                      send_oh, recv_oh):
    L = node_hidden.shape[0]
    h = node_hidden.shape[-1]
    f32, bf16 = jnp.float32, jnp.bfloat16

    def mmw(a, w):
        return jnp.dot(a.astype(bf16), w.astype(bf16), preferred_element_type=f32)

    def gru(gx, gh, hidden):
        r = jax.nn.sigmoid(gx[:, :h] + gh[:, :h])
        z = jax.nn.sigmoid(gx[:, h:2 * h] + gh[:, h:2 * h])
        n = jnp.tanh(gx[:, 2 * h:] + r * gh[:, 2 * h:])
        return (1.0 - z) * n + z * hidden

    send_f = send_oh.astype(f32)
    recv_f = recv_oh.astype(f32)
    na, ea = node_attr, edge_attr
    nh_list, eh_list = [], []
    for li in range(L):
        nh, eh = node_hidden[li], edge_hidden[li]
        src = send_f @ na
        dst = recv_f @ na
        x_e = jnp.concatenate([src, dst, ea], axis=-1)
        gx_e = mmw(x_e, params["w_e_i"][li]) + params["b_e_i"][li]
        gh_e = mmw(eh, params["w_e_h"][li]) + params["b_e_h"][li]
        new_eh = gru(gx_e, gh_e, eh)
        agg = recv_f.T @ new_eh
        x_n = jnp.concatenate([na, agg], axis=-1)
        gx_n = mmw(x_n, params["w_n_i"][li]) + params["b_n_i"][li]
        gh_n = mmw(nh, params["w_n_h"][li]) + params["b_n_h"][li]
        new_nh = gru(gx_n, gh_n, nh)
        na, ea = new_nh, new_eh
        nh_list.append(new_nh)
        eh_list.append(new_eh)
    return na, ea, jnp.stack(nh_list, axis=0), jnp.stack(eh_list, axis=0)


# --------------------------------------------------------------------------
if __name__ == "__main__":
    L = 2             # number of GN layers
    N = 16            # nodes
    E = 32            # edges
    FN = FE = H = 32  # node feat = edge feat = hidden (keeps layer dims fixed)

    root = jax.random.PRNGKey(0)
    k_na, k_ea, k_nh, k_eh, k_s, k_r, k_p = jax.random.split(root, 7)

    node_attr = jax.random.normal(k_na, (N, FN), jnp.float32)
    edge_attr = jax.random.normal(k_ea, (E, FE), jnp.float32)
    node_hidden = jax.random.normal(k_nh, (L, N, H), jnp.float32)
    edge_hidden = jax.random.normal(k_eh, (L, E, H), jnp.float32)
    senders = jax.random.randint(k_s, (E,), 0, N)
    receivers = jax.random.randint(k_r, (E,), 0, N)
    # One-hot matrices in f32 (exact gather/scatter, no per-layer casts in the
    # kernel); transpose hoisted out of the layer loop.
    send_oh = jax.nn.one_hot(senders, N, dtype=jnp.float32)     # [E, N]
    recv_oh = jax.nn.one_hot(receivers, N, dtype=jnp.float32)   # [E, N]
    recv_oh_t = jnp.transpose(recv_oh)                          # [N, E]

    params = init_params(k_p, L, FN, FE, H)

    fwd = jax.jit(multi_layer_recurrent_gn)
    na, ea, nh_stack, eh_stack = fwd(params, node_attr, edge_attr,
                                     node_hidden, edge_hidden,
                                     send_oh, recv_oh, recv_oh_t)
    jax.block_until_ready((na, ea, nh_stack, eh_stack))

    assert na.shape == (N, H)
    assert ea.shape == (E, H)
    assert nh_stack.shape == (L, N, H)
    assert eh_stack.shape == (L, E, H)

    # Correctness check vs. a pure-JAX reference with the same mixed precision.
    rna, rea, rnh, reh = jax.jit(reference_forward)(
        params, node_attr, edge_attr, node_hidden, edge_hidden, send_oh, recv_oh)
    for got, want in ((na, rna), (ea, rea), (nh_stack, rnh), (eh_stack, reh)):
        err = float(jnp.max(jnp.abs(got - want)))
        assert err < 2e-2, err

    print("KERNEL_OK")
</pallas_src>

<mosaic_0001>
module attributes {stable_mosaic.version = 11 : i64} {
  func.func @_gn_stack_kernel(%arg0: i32, %arg1: memref<16x32xf32, #tpu.memory_space<vmem>>, %arg2: memref<32x32xf32, #tpu.memory_space<vmem>>, %arg3: memref<1x16x32xf32, #tpu.memory_space<vmem>>, %arg4: memref<1x32x32xf32, #tpu.memory_space<vmem>>, %arg5: memref<32x16xf32, #tpu.memory_space<vmem>>, %arg6: memref<32x16xf32, #tpu.memory_space<vmem>>, %arg7: memref<16x32xf32, #tpu.memory_space<vmem>>, %arg8: memref<1x96x96xbf16, #tpu.memory_space<vmem>>, %arg9: memref<1x32x96xbf16, #tpu.memory_space<vmem>>, %arg10: memref<1x1x96xf32, #tpu.memory_space<vmem>>, %arg11: memref<1x1x96xf32, #tpu.memory_space<vmem>>, %arg12: memref<1x64x96xbf16, #tpu.memory_space<vmem>>, %arg13: memref<1x32x96xbf16, #tpu.memory_space<vmem>>, %arg14: memref<1x1x96xf32, #tpu.memory_space<vmem>>, %arg15: memref<1x1x96xf32, #tpu.memory_space<vmem>>, %arg16: memref<16x32xf32, #tpu.memory_space<vmem>>, %arg17: memref<32x32xf32, #tpu.memory_space<vmem>>, %arg18: memref<1x16x32xf32, #tpu.memory_space<vmem>>, %arg19: memref<1x32x32xf32, #tpu.memory_space<vmem>>) attributes {dimension_semantics = [#tpu.dimension_semantics<arbitrary>], iteration_bounds = array<i64: 2>, scalar_prefetch = 0 : i64, scratch_operands = 0 : i64, tpu.core_type = #tpu.core_type<tc>, window_params = [{pipeline_mode = #tpu.pipeline_mode<synchronous>, transform_indices = @transform_0, window_bounds = array<i64: 16, 32>}, {pipeline_mode = #tpu.pipeline_mode<synchronous>, transform_indices = @transform_1, window_bounds = array<i64: 32, 32>}, {transform_indices = @transform_2, window_bounds = array<i64: 1, 16, 32>}, {transform_indices = @transform_3, window_bounds = array<i64: 1, 32, 32>}, {pipeline_mode = #tpu.pipeline_mode<synchronous>, transform_indices = @transform_4, window_bounds = array<i64: 32, 16>}, {pipeline_mode = #tpu.pipeline_mode<synchronous>, transform_indices = @transform_5, window_bounds = array<i64: 32, 16>}, {pipeline_mode = #tpu.pipeline_mode<synchronous>, transform_indices = @transform_6, window_bounds = array<i64: 16, 32>}, {transform_indices = @transform_7, window_bounds = array<i64: 1, 96, 96>}, {transform_indices = @transform_8, window_bounds = array<i64: 1, 32, 96>}, {transform_indices = @transform_9, window_bounds = array<i64: 1, 1, 96>}, {transform_indices = @transform_10, window_bounds = array<i64: 1, 1, 96>}, {transform_indices = @transform_11, window_bounds = array<i64: 1, 64, 96>}, {transform_indices = @transform_12, window_bounds = array<i64: 1, 32, 96>}, {transform_indices = @transform_13, window_bounds = array<i64: 1, 1, 96>}, {transform_indices = @transform_14, window_bounds = array<i64: 1, 1, 96>}, {pipeline_mode = #tpu.pipeline_mode<synchronous>, transform_indices = @transform_15, window_bounds = array<i64: 16, 32>}, {pipeline_mode = #tpu.pipeline_mode<synchronous>, transform_indices = @transform_16, window_bounds = array<i64: 32, 32>}, {transform_indices = @transform_17, window_bounds = array<i64: 1, 16, 32>}, {transform_indices = @transform_18, window_bounds = array<i64: 1, 32, 32>}]} {
    %c0_i32 = arith.constant 0 : i32
    %0 = arith.cmpi eq, %arg0, %c0_i32 : i32
    %1 = arith.extui %0 : i1 to i32
    %c0_i32_0 = arith.constant 0 : i32
    %2 = arith.cmpi ne, %1, %c0_i32_0 : i32
    scf.if %2 {
      %c0_65 = arith.constant 0 : index
      %c0_66 = arith.constant 0 : index
      %119 = vector.load %arg1[%c0_65, %c0_66] : memref<16x32xf32, #tpu.memory_space<vmem>>, vector<16x32xf32>
      %c0_67 = arith.constant 0 : index
      %c0_68 = arith.constant 0 : index
      %120 = vector.load %arg16[%c0_67, %c0_68] : memref<16x32xf32, #tpu.memory_space<vmem>>, vector<16x32xf32>
      tpu.vector_store %arg16[%c0_67, %c0_68], %119 {strides = array<i32>} : memref<16x32xf32, #tpu.memory_space<vmem>>, vector<16x32xf32>,
      %c0_69 = arith.constant 0 : index
      %c0_70 = arith.constant 0 : index
      %121 = vector.load %arg2[%c0_69, %c0_70] : memref<32x32xf32, #tpu.memory_space<vmem>>, vector<32x32xf32>
      %c0_71 = arith.constant 0 : index
      %c0_72 = arith.constant 0 : index
      %122 = vector.load %arg17[%c0_71, %c0_72] : memref<32x32xf32, #tpu.memory_space<vmem>>, vector<32x32xf32>
      tpu.vector_store %arg17[%c0_71, %c0_72], %121 {strides = array<i32>} : memref<32x32xf32, #tpu.memory_space<vmem>>, vector<32x32xf32>,
    } else {
    }
    %c0 = arith.constant 0 : index
    %c0_1 = arith.constant 0 : index
    %3 = vector.load %arg16[%c0, %c0_1] : memref<16x32xf32, #tpu.memory_space<vmem>>, vector<16x32xf32>
    %c0_2 = arith.constant 0 : index
    %c0_3 = arith.constant 0 : index
    %4 = vector.load %arg17[%c0_2, %c0_3] : memref<32x32xf32, #tpu.memory_space<vmem>>, vector<32x32xf32>
    %c0_4 = arith.constant 0 : index
    %c0_5 = arith.constant 0 : index
    %c0_6 = arith.constant 0 : index
    %5 = vector.load %arg3[%c0_4, %c0_5, %c0_6] : memref<1x16x32xf32, #tpu.memory_space<vmem>>, vector<1x16x32xf32>
    %6 = vector.shape_cast %5 : vector<1x16x32xf32> to vector<16x32xf32>
    %c0_7 = arith.constant 0 : index
    %c0_8 = arith.constant 0 : index
    %c0_9 = arith.constant 0 : index
    %7 = vector.load %arg4[%c0_7, %c0_8, %c0_9] : memref<1x32x32xf32, #tpu.memory_space<vmem>>, vector<1x32x32xf32>
    %8 = vector.shape_cast %7 : vector<1x32x32xf32> to vector<32x32xf32>
    %9 = arith.truncf %3 : vector<16x32xf32> to vector<16x32xbf16>
    %10 = arith.truncf %4 : vector<32x32xf32> to vector<32x32xbf16>
    %11 = arith.truncf %6 : vector<16x32xf32> to vector<16x32xbf16>
    %12 = arith.truncf %8 : vector<32x32xf32> to vector<32x32xbf16>
    %c0_10 = arith.constant 0 : index
    %c0_11 = arith.constant 0 : index
    %c0_12 = arith.constant 0 : index
    %13 = vector.load %arg8[%c0_10, %c0_11, %c0_12] : memref<1x96x96xbf16, #tpu.memory_space<vmem>>, vector<1x96x96xbf16>
    %14 = vector.shape_cast %13 : vector<1x96x96xbf16> to vector<96x96xbf16>
    %15 = vector.extract_strided_slice %14 {offsets = [0, 0], sizes = [32, 96], strides = [1, 1]} : vector<96x96xbf16> to vector<32x96xbf16>
    %cst = arith.constant dense<0.000000e+00> : vector<16x96xf32>
    %16 = tpu.matmul %9, %15, %cst {dimension_numbers = #tpu.dot_dimension_numbers<[1], [0], [0], [1], [0, 0, 1, 1], [], []>} : vector<16x32xbf16>, vector<32x96xbf16>, vector<16x96xf32> -> vector<16x96xf32>
    %17 = vector.extract_strided_slice %14 {offsets = [32, 0], sizes = [32, 96], strides = [1, 1]} : vector<96x96xbf16> to vector<32x96xbf16>
    %cst_13 = arith.constant dense<0.000000e+00> : vector<16x96xf32>
    %18 = tpu.matmul %9, %17, %cst_13 {dimension_numbers = #tpu.dot_dimension_numbers<[1], [0], [0], [1], [0, 0, 1, 1], [], []>} : vector<16x32xbf16>, vector<32x96xbf16>, vector<16x96xf32> -> vector<16x96xf32>
    %c0_14 = arith.constant 0 : index
    %c0_15 = arith.constant 0 : index
    %19 = vector.load %arg5[%c0_14, %c0_15] : memref<32x16xf32, #tpu.memory_space<vmem>>, vector<32x16xf32>
    %cst_16 = arith.constant dense<0.000000e+00> : vector<32x96xf32>
    %20 = tpu.matmul %19, %16, %cst_16 {dimension_numbers = #tpu.dot_dimension_numbers<[1], [0], [0], [1], [0, 0, 1, 1], [], []>} : vector<32x16xf32>, vector<16x96xf32>, vector<32x96xf32> -> vector<32x96xf32>
    %c0_17 = arith.constant 0 : index
    %c0_18 = arith.constant 0 : index
    %21 = vector.load %arg6[%c0_17, %c0_18] : memref<32x16xf32, #tpu.memory_space<vmem>>, vector<32x16xf32>
    %cst_19 = arith.constant dense<0.000000e+00> : vector<32x96xf32>
    %22 = tpu.matmul %21, %18, %cst_19 {dimension_numbers = #tpu.dot_dimension_numbers<[1], [0], [0], [1], [0, 0, 1, 1], [], []>} : vector<32x16xf32>, vector<16x96xf32>, vector<32x96xf32> -> vector<32x96xf32>
    %23 = arith.addf %20, %22 : vector<32x96xf32>
    %24 = vector.extract_strided_slice %14 {offsets = [64, 0], sizes = [32, 96], strides = [1, 1]} : vector<96x96xbf16> to vector<32x96xbf16>
    %cst_20 = arith.constant dense<0.000000e+00> : vector<32x96xf32>
    %25 = tpu.matmul %10, %24, %cst_20 {dimension_numbers = #tpu.dot_dimension_numbers<[1], [0], [0], [1], [0, 0, 1, 1], [], []>} : vector<32x32xbf16>, vector<32x96xbf16>, vector<32x96xf32> -> vector<32x96xf32>
    %26 = arith.addf %23, %25 : vector<32x96xf32>
    %c0_21 = arith.constant 0 : index
    %c0_22 = arith.constant 0 : index
    %c0_23 = arith.constant 0 : index
    %27 = vector.load %arg10[%c0_21, %c0_22, %c0_23] : memref<1x1x96xf32, #tpu.memory_space<vmem>>, vector<1x1x96xf32>
    %28 = vector.shape_cast %27 : vector<1x1x96xf32> to vector<1x96xf32>
    %29 = vector.broadcast %28 : vector<1x96xf32> to vector<32x96xf32>
    %30 = arith.addf %26, %29 : vector<32x96xf32>
    %c0_24 = arith.constant 0 : index
    %c0_25 = arith.constant 0 : index
    %c0_26 = arith.constant 0 : index
    %31 = vector.load %arg9[%c0_24, %c0_25, %c0_26] : memref<1x32x96xbf16, #tpu.memory_space<vmem>>, vector<1x32x96xbf16>
    %32 = vector.shape_cast %31 : vector<1x32x96xbf16> to vector<32x96xbf16>
    %cst_27 = arith.constant dense<0.000000e+00> : vector<32x96xf32>
    %33 = tpu.matmul %12, %32, %cst_27 {dimension_numbers = #tpu.dot_dimension_numbers<[1], [0], [0], [1], [0, 0, 1, 1], [], []>} : vector<32x32xbf16>, vector<32x96xbf16>, vector<32x96xf32> -> vector<32x96xf32>
    %c0_28 = arith.constant 0 : index
    %c0_29 = arith.constant 0 : index
    %c0_30 = arith.constant 0 : index
    %34 = vector.load %arg11[%c0_28, %c0_29, %c0_30] : memref<1x1x96xf32, #tpu.memory_space<vmem>>, vector<1x1x96xf32>
    %35 = vector.shape_cast %34 : vector<1x1x96xf32> to vector<1x96xf32>
    %36 = vector.broadcast %35 : vector<1x96xf32> to vector<32x96xf32>
    %37 = arith.addf %33, %36 : vector<32x96xf32>
    %38 = vector.extract_strided_slice %30 {offsets = [0, 0], sizes = [32, 32], strides = [1, 1]} : vector<32x96xf32> to vector<32x32xf32>
    %39 = vector.extract_strided_slice %37 {offsets = [0, 0], sizes = [32, 32], strides = [1, 1]} : vector<32x96xf32> to vector<32x32xf32>
    %40 = arith.addf %38, %39 : vector<32x32xf32>
    %41 = arith.negf %40 : vector<32x32xf32>
    %42 = math.exp %41 : vector<32x32xf32>
    %cst_31 = arith.constant 1.000000e+00 : f32
    %43 = vector.broadcast %cst_31 : f32 to vector<32x32xf32>
    %44 = arith.addf %43, %42 : vector<32x32xf32>
    %45 = arith.divf %43, %44 : vector<32x32xf32>
    %46 = vector.extract_strided_slice %30 {offsets = [0, 32], sizes = [32, 32], strides = [1, 1]} : vector<32x96xf32> to vector<32x32xf32>
    %47 = vector.extract_strided_slice %37 {offsets = [0, 32], sizes = [32, 32], strides = [1, 1]} : vector<32x96xf32> to vector<32x32xf32>
    %48 = arith.addf %46, %47 : vector<32x32xf32>
    %49 = arith.negf %48 : vector<32x32xf32>
    %50 = math.exp %49 : vector<32x32xf32>
    %cst_32 = arith.constant 1.000000e+00 : f32
    %51 = vector.broadcast %cst_32 : f32 to vector<32x32xf32>
    %52 = arith.addf %51, %50 : vector<32x32xf32>
    %53 = arith.divf %51, %52 : vector<32x32xf32>
    %54 = vector.extract_strided_slice %30 {offsets = [0, 64], sizes = [32, 32], strides = [1, 1]} : vector<32x96xf32> to vector<32x32xf32>
    %55 = vector.extract_strided_slice %37 {offsets = [0, 64], sizes = [32, 32], strides = [1, 1]} : vector<32x96xf32> to vector<32x32xf32>
    %56 = arith.mulf %45, %55 : vector<32x32xf32>
    %57 = arith.addf %54, %56 : vector<32x32xf32>
    %58 = math.tanh %57 : vector<32x32xf32>
    %cst_33 = arith.constant 1.000000e+00 : f32
    %59 = vector.broadcast %cst_33 : f32 to vector<32x32xf32>
    %60 = arith.subf %59, %53 : vector<32x32xf32>
    %61 = arith.mulf %60, %58 : vector<32x32xf32>
    %62 = arith.mulf %53, %8 : vector<32x32xf32>
    %63 = arith.addf %61, %62 : vector<32x32xf32>
    %c0_34 = arith.constant 0 : index
    %c0_35 = arith.constant 0 : index
    %64 = vector.load %arg7[%c0_34, %c0_35] : memref<16x32xf32, #tpu.memory_space<vmem>>, vector<16x32xf32>
    %cst_36 = arith.constant dense<0.000000e+00> : vector<16x32xf32>
    %65 = tpu.matmul %64, %63, %cst_36 {dimension_numbers = #tpu.dot_dimension_numbers<[1], [0], [0], [1], [0, 0, 1, 1], [], []>} : vector<16x32xf32>, vector<32x32xf32>, vector<16x32xf32> -> vector<16x32xf32>
    %c0_37 = arith.constant 0 : index
    %c0_38 = arith.constant 0 : index
    %c0_39 = arith.constant 0 : index
    %66 = vector.load %arg12[%c0_37, %c0_38, %c0_39] : memref<1x64x96xbf16, #tpu.memory_space<vmem>>, vector<1x64x96xbf16>
    %67 = vector.shape_cast %66 : vector<1x64x96xbf16> to vector<64x96xbf16>
    %68 = vector.extract_strided_slice %67 {offsets = [0, 0], sizes = [32, 96], strides = [1, 1]} : vector<64x96xbf16> to vector<32x96xbf16>
    %cst_40 = arith.constant dense<0.000000e+00> : vector<16x96xf32>
    %69 = tpu.matmul %9, %68, %cst_40 {dimension_numbers = #tpu.dot_dimension_numbers<[1], [0], [0], [1], [0, 0, 1, 1], [], []>} : vector<16x32xbf16>, vector<32x96xbf16>, vector<16x96xf32> -> vector<16x96xf32>
    %70 = arith.truncf %65 : vector<16x32xf32> to vector<16x32xbf16>
    %71 = vector.extract_strided_slice %67 {offsets = [32, 0], sizes = [32, 96], strides = [1, 1]} : vector<64x96xbf16> to vector<32x96xbf16>
    %cst_41 = arith.constant dense<0.000000e+00> : vector<16x96xf32>
    %72 = tpu.matmul %70, %71, %cst_41 {dimension_numbers = #tpu.dot_dimension_numbers<[1], [0], [0], [1], [0, 0, 1, 1], [], []>} : vector<16x32xbf16>, vector<32x96xbf16>, vector<16x96xf32> -> vector<16x96xf32>
    %73 = arith.addf %69, %72 : vector<16x96xf32>
    %c0_42 = arith.constant 0 : index
    %c0_43 = arith.constant 0 : index
    %c0_44 = arith.constant 0 : index
    %74 = vector.load %arg14[%c0_42, %c0_43, %c0_44] : memref<1x1x96xf32, #tpu.memory_space<vmem>>, vector<1x1x96xf32>
    %75 = vector.shape_cast %74 : vector<1x1x96xf32> to vector<1x96xf32>
    %76 = vector.broadcast %75 : vector<1x96xf32> to vector<16x96xf32>
    %77 = arith.addf %73, %76 : vector<16x96xf32>
    %c0_45 = arith.constant 0 : index
    %c0_46 = arith.constant 0 : index
    %c0_47 = arith.constant 0 : index
    %78 = vector.load %arg13[%c0_45, %c0_46, %c0_47] : memref<1x32x96xbf16, #tpu.memory_space<vmem>>, vector<1x32x96xbf16>
    %79 = vector.shape_cast %78 : vector<1x32x96xbf16> to vector<32x96xbf16>
    %cst_48 = arith.constant dense<0.000000e+00> : vector<16x96xf32>
    %80 = tpu.matmul %11, %79, %cst_48 {dimension_numbers = #tpu.dot_dimension_numbers<[1], [0], [0], [1], [0, 0, 1, 1], [], []>} : vector<16x32xbf16>, vector<32x96xbf16>, vector<16x96xf32> -> vector<16x96xf32>
    %c0_49 = arith.constant 0 : index
    %c0_50 = arith.constant 0 : index
    %c0_51 = arith.constant 0 : index
    %81 = vector.load %arg15[%c0_49, %c0_50, %c0_51] : memref<1x1x96xf32, #tpu.memory_space<vmem>>, vector<1x1x96xf32>
    %82 = vector.shape_cast %81 : vector<1x1x96xf32> to vector<1x96xf32>
    %83 = vector.broadcast %82 : vector<1x96xf32> to vector<16x96xf32>
    %84 = arith.addf %80, %83 : vector<16x96xf32>
    %85 = vector.extract_strided_slice %77 {offsets = [0, 0], sizes = [16, 32], strides = [1, 1]} : vector<16x96xf32> to vector<16x32xf32>
    %86 = vector.extract_strided_slice %84 {offsets = [0, 0], sizes = [16, 32], strides = [1, 1]} : vector<16x96xf32> to vector<16x32xf32>
    %87 = arith.addf %85, %86 : vector<16x32xf32>
    %88 = arith.negf %87 : vector<16x32xf32>
    %89 = math.exp %88 : vector<16x32xf32>
    %cst_52 = arith.constant 1.000000e+00 : f32
    %90 = vector.broadcast %cst_52 : f32 to vector<16x32xf32>
    %91 = arith.addf %90, %89 : vector<16x32xf32>
    %92 = arith.divf %90, %91 : vector<16x32xf32>
    %93 = vector.extract_strided_slice %77 {offsets = [0, 32], sizes = [16, 32], strides = [1, 1]} : vector<16x96xf32> to vector<16x32xf32>
    %94 = vector.extract_strided_slice %84 {offsets = [0, 32], sizes = [16, 32], strides = [1, 1]} : vector<16x96xf32> to vector<16x32xf32>
    %95 = arith.addf %93, %94 : vector<16x32xf32>
    %96 = arith.negf %95 : vector<16x32xf32>
    %97 = math.exp %96 : vector<16x32xf32>
    %cst_53 = arith.constant 1.000000e+00 : f32
    %98 = vector.broadcast %cst_53 : f32 to vector<16x32xf32>
    %99 = arith.addf %98, %97 : vector<16x32xf32>
    %100 = arith.divf %98, %99 : vector<16x32xf32>
    %101 = vector.extract_strided_slice %77 {offsets = [0, 64], sizes = [16, 32], strides = [1, 1]} : vector<16x96xf32> to vector<16x32xf32>
    %102 = vector.extract_strided_slice %84 {offsets = [0, 64], sizes = [16, 32], strides = [1, 1]} : vector<16x96xf32> to vector<16x32xf32>
    %103 = arith.mulf %92, %102 : vector<16x32xf32>
    %104 = arith.addf %101, %103 : vector<16x32xf32>
    %105 = math.tanh %104 : vector<16x32xf32>
    %cst_54 = arith.constant 1.000000e+00 : f32
    %106 = vector.broadcast %cst_54 : f32 to vector<16x32xf32>
    %107 = arith.subf %106, %100 : vector<16x32xf32>
    %108 = arith.mulf %107, %105 : vector<16x32xf32>
    %109 = arith.mulf %100, %6 : vector<16x32xf32>
    %110 = arith.addf %108, %109 : vector<16x32xf32>
    %c0_55 = arith.constant 0 : index
    %c0_56 = arith.constant 0 : index
    %c0_57 = arith.constant 0 : index
    %111 = vector.load %arg18[%c0_55, %c0_56, %c0_57] : memref<1x16x32xf32, #tpu.memory_space<vmem>>, vector<1x16x32xf32>
    %112 = vector.shape_cast %111 : vector<1x16x32xf32> to vector<16x32xf32>
    %113 = vector.shape_cast %110 : vector<16x32xf32> to vector<1x16x32xf32>
    tpu.vector_store %arg18[%c0_55, %c0_56, %c0_57], %113 {strides = array<i32>} : memref<1x16x32xf32, #tpu.memory_space<vmem>>, vector<1x16x32xf32>,
    %c0_58 = arith.constant 0 : index
    %c0_59 = arith.constant 0 : index
    %c0_60 = arith.constant 0 : index
    %114 = vector.load %arg19[%c0_58, %c0_59, %c0_60] : memref<1x32x32xf32, #tpu.memory_space<vmem>>, vector<1x32x32xf32>
    %115 = vector.shape_cast %114 : vector<1x32x32xf32> to vector<32x32xf32>
    %116 = vector.shape_cast %63 : vector<32x32xf32> to vector<1x32x32xf32>
    tpu.vector_store %arg19[%c0_58, %c0_59, %c0_60], %116 {strides = array<i32>} : memref<1x32x32xf32, #tpu.memory_space<vmem>>, vector<1x32x32xf32>,
    %c0_61 = arith.constant 0 : index
    %c0_62 = arith.constant 0 : index
    %117 = vector.load %arg16[%c0_61, %c0_62] : memref<16x32xf32, #tpu.memory_space<vmem>>, vector<16x32xf32>
    tpu.vector_store %arg16[%c0_61, %c0_62], %110 {strides = array<i32>} : memref<16x32xf32, #tpu.memory_space<vmem>>, vector<16x32xf32>,
    %c0_63 = arith.constant 0 : index
    %c0_64 = arith.constant 0 : index
    %118 = vector.load %arg17[%c0_63, %c0_64] : memref<32x32xf32, #tpu.memory_space<vmem>>, vector<32x32xf32>
    tpu.vector_store %arg17[%c0_63, %c0_64], %63 {strides = array<i32>} : memref<32x32xf32, #tpu.memory_space<vmem>>, vector<32x32xf32>,
    return
  }
  func.func @transform_0(%arg0: i32) -> (i32, i32) {
    %c0_i32 = arith.constant 0 : i32
    %c0_i32_0 = arith.constant 0 : i32
    %c0_i32_1 = arith.constant 0 : i32
    return %c0_i32, %c0_i32_0 : i32, i32
  }
  func.func @transform_1(%arg0: i32) -> (i32, i32) {
    %c0_i32 = arith.constant 0 : i32
    %c0_i32_0 = arith.constant 0 : i32
    %c0_i32_1 = arith.constant 0 : i32
    return %c0_i32, %c0_i32_0 : i32, i32
  }
  func.func @transform_2(%arg0: i32) -> (i32, i32, i32) {
    %c0_i32 = arith.constant 0 : i32
    %c0_i32_0 = arith.constant 0 : i32
    %c0_i32_1 = arith.constant 0 : i32
    return %arg0, %c0_i32, %c0_i32_0 : i32, i32, i32
  }
  func.func @transform_3(%arg0: i32) -> (i32, i32, i32) {
    %c0_i32 = arith.constant 0 : i32
    %c0_i32_0 = arith.constant 0 : i32
    %c0_i32_1 = arith.constant 0 : i32
    return %arg0, %c0_i32, %c0_i32_0 : i32, i32, i32
  }
  func.func @transform_4(%arg0: i32) -> (i32, i32) {
    %c0_i32 = arith.constant 0 : i32
    %c0_i32_0 = arith.constant 0 : i32
    %c0_i32_1 = arith.constant 0 : i32
    return %c0_i32, %c0_i32_0 : i32, i32
  }
  func.func @transform_5(%arg0: i32) -> (i32, i32) {
    %c0_i32 = arith.constant 0 : i32
    %c0_i32_0 = arith.constant 0 : i32
    %c0_i32_1 = arith.constant 0 : i32
    return %c0_i32, %c0_i32_0 : i32, i32
  }
  func.func @transform_6(%arg0: i32) -> (i32, i32) {
    %c0_i32 = arith.constant 0 : i32
    %c0_i32_0 = arith.constant 0 : i32
    %c0_i32_1 = arith.constant 0 : i32
    return %c0_i32, %c0_i32_0 : i32, i32
  }
  func.func @transform_7(%arg0: i32) -> (i32, i32, i32) {
    %c0_i32 = arith.constant 0 : i32
    %c0_i32_0 = arith.constant 0 : i32
    %c0_i32_1 = arith.constant 0 : i32
    return %arg0, %c0_i32, %c0_i32_0 : i32, i32, i32
  }
  func.func @transform_8(%arg0: i32) -> (i32, i32, i32) {
    %c0_i32 = arith.constant 0 : i32
    %c0_i32_0 = arith.constant 0 : i32
    %c0_i32_1 = arith.constant 0 : i32
    return %arg0, %c0_i32, %c0_i32_0 : i32, i32, i32
  }
  func.func @transform_9(%arg0: i32) -> (i32, i32, i32) {
    %c0_i32 = arith.constant 0 : i32
    %c0_i32_0 = arith.constant 0 : i32
    %c0_i32_1 = arith.constant 0 : i32
    return %arg0, %c0_i32, %c0_i32_0 : i32, i32, i32
  }
  func.func @transform_10(%arg0: i32) -> (i32, i32, i32) {
    %c0_i32 = arith.constant 0 : i32
    %c0_i32_0 = arith.constant 0 : i32
    %c0_i32_1 = arith.constant 0 : i32
    return %arg0, %c0_i32, %c0_i32_0 : i32, i32, i32
  }
  func.func @transform_11(%arg0: i32) -> (i32, i32, i32) {
    %c0_i32 = arith.constant 0 : i32
    %c0_i32_0 = arith.constant 0 : i32
    %c0_i32_1 = arith.constant 0 : i32
    return %arg0, %c0_i32, %c0_i32_0 : i32, i32, i32
  }
  func.func @transform_12(%arg0: i32) -> (i32, i32, i32) {
    %c0_i32 = arith.constant 0 : i32
    %c0_i32_0 = arith.constant 0 : i32
    %c0_i32_1 = arith.constant 0 : i32
    return %arg0, %c0_i32, %c0_i32_0 : i32, i32, i32
  }
  func.func @transform_13(%arg0: i32) -> (i32, i32, i32) {
    %c0_i32 = arith.constant 0 : i32
    %c0_i32_0 = arith.constant 0 : i32
    %c0_i32_1 = arith.constant 0 : i32
    return %arg0, %c0_i32, %c0_i32_0 : i32, i32, i32
  }
  func.func @transform_14(%arg0: i32) -> (i32, i32, i32) {
    %c0_i32 = arith.constant 0 : i32
    %c0_i32_0 = arith.constant 0 : i32
    %c0_i32_1 = arith.constant 0 : i32
    return %arg0, %c0_i32, %c0_i32_0 : i32, i32, i32
  }
  func.func @transform_15(%arg0: i32) -> (i32, i32) {
    %c0_i32 = arith.constant 0 : i32
    %c0_i32_0 = arith.constant 0 : i32
    %c0_i32_1 = arith.constant 0 : i32
    return %c0_i32, %c0_i32_0 : i32, i32
  }
  func.func @transform_16(%arg0: i32) -> (i32, i32) {
    %c0_i32 = arith.constant 0 : i32
    %c0_i32_0 = arith.constant 0 : i32
    %c0_i32_1 = arith.constant 0 : i32
    return %c0_i32, %c0_i32_0 : i32, i32
  }
  func.func @transform_17(%arg0: i32) -> (i32, i32, i32) {
    %c0_i32 = arith.constant 0 : i32
    %c0_i32_0 = arith.constant 0 : i32
    %c0_i32_1 = arith.constant 0 : i32
    return %arg0, %c0_i32, %c0_i32_0 : i32, i32, i32
  }
  func.func @transform_18(%arg0: i32) -> (i32, i32, i32) {
    %c0_i32 = arith.constant 0 : i32
    %c0_i32_0 = arith.constant 0 : i32
    %c0_i32_1 = arith.constant 0 : i32
    return %arg0, %c0_i32, %c0_i32_0 : i32, i32, i32
  }
}

</mosaic_0001>

<llo_original>
// kernel: multi_layer_recurrent_gn.1
$region0: #{multi_layer_recurrent_gn.1}
  #allocation0 [shape = 'u32[]', space=smem, size = 0x4, offset = 0x4, fixed_abs, tag = 'smem constant byte address 0x4 - core index']
  #allocation1 [shape = 'u32[72,128]{1,0:T(1,128)}', space=vmem, size = 0x9000, scoped, tag = 'internal scratch']
  %s0 = inlined_call_operand.hbm [shape: f32[16,32], index: 0, kind: input, shape index: {}]
  %s1 = inlined_call_operand.hbm [shape: f32[32,32], index: 1, kind: input, shape index: {}]
  %s2 = inlined_call_operand.hbm [shape: f32[2,16,32], index: 2, kind: input, shape index: {}]
  %s3 = inlined_call_operand.hbm [shape: f32[2,32,32], index: 3, kind: input, shape index: {}]
  %s4 = inlined_call_operand.vmem [shape: f32[32,16], index: 4, kind: input, shape index: {}]
  %s5 = inlined_call_operand.vmem [shape: f32[32,16], index: 5, kind: input, shape index: {}]
  %s6 = inlined_call_operand.hbm [shape: f32[16,32], index: 6, kind: input, shape index: {}]
  %s7 = inlined_call_operand.vmem [shape: bf16[2,96,96], index: 7, kind: input, shape index: {}]
  %s8 = inlined_call_operand.hbm [shape: bf16[2,32,96], index: 8, kind: input, shape index: {}]
  %s9 = inlined_call_operand.vmem [shape: f32[2,1,96], index: 9, kind: input, shape index: {}]
  %s10 = inlined_call_operand.vmem [shape: f32[2,1,96], index: 10, kind: input, shape index: {}]
  %s11 = inlined_call_operand.hbm [shape: bf16[2,64,96], index: 11, kind: input, shape index: {}]
  %s12 = inlined_call_operand.hbm [shape: bf16[2,32,96], index: 12, kind: input, shape index: {}]
  %s13 = inlined_call_operand.hbm [shape: f32[2,1,96], index: 13, kind: input, shape index: {}]
  %s14 = inlined_call_operand.hbm [shape: f32[2,1,96], index: 14, kind: input, shape index: {}]
  %s15 = inlined_call_operand.hbm [shape: f32[16,32], index: 15, kind: output, shape index: {0}]
  %s16 = inlined_call_operand.hbm [shape: f32[32,32], index: 16, kind: output, shape index: {1}]
  %s17 = inlined_call_operand.hbm [shape: f32[2,16,32], index: 17, kind: output, shape index: {2}]
  %s18 = inlined_call_operand.hbm [shape: f32[2,32,32], index: 18, kind: output, shape index: {3}]
  %19 = xla_tuple %s15, %s16, %s17, %s18
  %s20 = sld [smem:[#allocation0]]
  $region161: #{multi_layer_recurrent_gn.1} parent=0
    _
  %s22 = ssub.s32 1, %s20
  %s23 = scalar_select 0, %s22, %s20
  $region1: #{multi_layer_recurrent_gn.1} parent=0
    #allocation2 [shape = 'u8[8192]{0}', space=vmem, size = 0x2000, scoped, tag = 'input window, operand 0, single buffered']
    #allocation3 [shape = 's32[2]{0}', space=sflag, size = 0x8, scoped, tag = 'scoped memory for multi_layer_recurrent_gn.1']
    #allocation4 [shape = 's32[2]{0}', space=sflag, size = 0x8, scoped, tag = 'scoped memory for multi_layer_recurrent_gn.1']
    #allocation5 [shape = 'u8[16384]{0}', space=vmem, size = 0x4000, scoped, tag = 'input window, operand 1, single buffered']
    #allocation6 [shape = 's32[1]{0}', space=sflag, size = 0x4, scoped, tag = 'scoped memory for multi_layer_recurrent_gn.1']
    #allocation7 [shape = 'u8[16384]{0}', space=vmem, size = 0x4000, scoped, tag = 'input window, operand 2']
    #allocation8 [shape = 'u8[32768]{0}', space=vmem, size = 0x8000, scoped, tag = 'input window, operand 3']
    #allocation9 [shape = 'u8[8192]{0}', space=vmem, size = 0x2000, scoped, tag = 'input window, operand 6, single buffered']
    #allocation10 [shape = 'u8[16384]{0}', space=vmem, size = 0x4000, scoped, tag = 'input window, operand 8']
    #allocation11 [shape = 's32[2]{0}', space=sflag, size = 0x8, scoped, tag = 'scoped memory for multi_layer_recurrent_gn.1']
    #allocation12 [shape = 'u8[32768]{0}', space=vmem, size = 0x8000, scoped, tag = 'input window, operand 11']
    #allocation13 [shape = 'u8[16384]{0}', space=vmem, size = 0x4000, scoped, tag = 'input window, operand 12']
    #allocation14 [shape = 's32[2]{0}', space=sflag, size = 0x8, scoped, tag = 'scoped memory for multi_layer_recurrent_gn.1']
    #allocation15 [shape = 'u8[1024]{0}', space=vmem, size = 0x400, scoped, tag = 'input window, operand 13']
    #allocation16 [shape = 'u8[1024]{0}', space=vmem, size = 0x400, scoped, tag = 'input window, operand 14']
    #allocation17 [shape = 's32[2]{0}', space=sflag, size = 0x8, scoped, tag = 'scoped memory for multi_layer_recurrent_gn.1']
    #allocation18 [shape = 'u8[8192]{0}', space=vmem, size = 0x2000, scoped, tag = 'output window, operand 0, single buffered']
    #allocation19 [shape = 'u8[16384]{0}', space=vmem, size = 0x4000, scoped, tag = 'output window, operand 1, single buffered']
    #allocation20 [shape = 's32[1]{0}', space=sflag, size = 0x4, scoped, tag = 'scoped memory for multi_layer_recurrent_gn.1']
    #allocation21 [shape = 'u8[16384]{0}', space=vmem, size = 0x4000, scoped, tag = 'output window, operand 2']
    #allocation22 [shape = 'u8[32768]{0}', space=vmem, size = 0x8000, scoped, tag = 'output window, operand 3']
    %24 = vsyncpa [#allocation3], 0
    %25 = vsyncpa [#allocation6], 0
    %26 = vsyncpa [#allocation11], 0
    %s27 = scalar_lea.sflag [#allocation11], 1
    %28 = vsyncpa %s27, 0
    %29 = vsyncpa [#allocation14], 0
    %s30 = scalar_lea.sflag [#allocation14], 1
    %31 = vsyncpa %s30, 0
    %32 = vsyncpa [#allocation17], 0
    %s33 = scalar_lea.sflag [#allocation17], 1
    %34 = vsyncpa %s33, 0
    %35 = vsyncpa [#allocation4], 0
    %36 = vsyncpa [#allocation20], 0
    loop: start=0, step=1, limit=4
    $region2: #{multi_layer_recurrent_gn.1} parent=1 // loop_pre_header
      _
    $region3: #{multi_layer_recurrent_gn.1} parent=1 // loop_header
      %s38 = sphi 0, %s42
      %p39 = scmp.ge.s32.totalorder %s38, 4
      %s46 = sphi 0, %s46
      %s48 = sphi 0, %s46
      %s49 = sphi 0, %s48
      %s63 = sphi 0, %s49
      %s67 = sphi 0, %s67
      %s69 = sphi 0, %s67
      %s70 = sphi 0, %s69
      %s84 = sphi 0, %s70
      %s90 = sphi 0, %s92
      %s93 = sphi 0, %s90
      %s94 = sphi 0, %s93
      %s110 = sphi 0, %s94
      %s116 = sphi 0, %s118
      %s119 = sphi 0, %s116
      %s120 = sphi 0, %s119
      %s136 = sphi 0, %s120
      %s140 = sphi 0, %s140
      %s142 = sphi 0, %s140
      %s143 = sphi 0, %s142
      %s157 = sphi 0, %s143
      %s161 = sphi 0, %s161
      %s163 = sphi 0, %s161
      %s164 = sphi 0, %s163
      %s178 = sphi 0, %s164
      %s182 = sphi 0, %s182
      %s184 = sphi 0, %s182
      %s185 = sphi 0, %s184
      %s199 = sphi 0, %s185
      %s205 = sphi 0, %s207
      %s208 = sphi 0, %s205
      %s209 = sphi 0, %s208
      %s225 = sphi 0, %s209
      %s231 = sphi 0, %s233
      %s234 = sphi 0, %s231
      %s235 = sphi 0, %s234
      %s251 = sphi 0, %s235
      %s257 = sphi 0, %s259
      %s260 = sphi 0, %s257
      %s261 = sphi 0, %s260
      %s277 = sphi 0, %s261
      %s283 = sphi 0, %s285
      %s286 = sphi 0, %s283
      %s287 = sphi 0, %s286
      %s303 = sphi 0, %s287
      %s309 = sphi 0, %s311
      %s312 = sphi 0, %s309
      %s313 = sphi 0, %s312
      %s329 = sphi 0, %s313
      %s335 = sphi 0, %s337
      %s338 = sphi 0, %s335
      %s339 = sphi 0, %s338
      %s355 = sphi 0, %s339
      %s361 = sphi 0, %s363
      %s364 = sphi 0, %s361
      %s365 = sphi 0, %s364
      %s381 = sphi 0, %s365
      %s387 = sphi 0, %s389
      %s390 = sphi 0, %s387
      %s391 = sphi 0, %s390
      %s407 = sphi 0, %s391
      %s411 = sphi 0, %s411
      %s413 = sphi 0, %s411
      %s414 = sphi 0, %s413
      %s428 = sphi 0, %s414
      %s432 = sphi 0, %s432
      %s434 = sphi 0, %s432
      %s435 = sphi 0, %s434
      %s449 = sphi 0, %s435
      %s455 = sphi 0, %s457
      %s458 = sphi 0, %s455
      %s459 = sphi 0, %s458
      %s475 = sphi 0, %s459
      %s481 = sphi 0, %s483
      %s484 = sphi 0, %s481
      %s485 = sphi 0, %s484
      %s501 = sphi 0, %s485
    $region4: #{multi_layer_recurrent_gn.1} parent=1 // loop_header_branch
      %41 = sbr.rel (%p39) target = $region8
    $region5: #{multi_layer_recurrent_gn.1} parent=1 // loop_body
      %s43 = ssub.s32 %s38, 1
      %s44 = ssub.s32 %s38, 2
      %s45 = sadd.s32 %s38, 1
      %s47 = sadd.s32 %s46, 1
      %p50 = scmp.eq.s32.totalorder %s38, 1
      %p51 = scmp.ne.s32.totalorder %s46, %s48
      %p52 = scmp.eq.s32.totalorder %s38, 0
      %p53 = por %p51, %p52
      %p54 = scmp.ne.s32.totalorder %s46, %s48
      %p55 = scmp.eq.s32.totalorder %s43, 1
      %p56 = por %p54, %p55
      %p57 = scmp.ne.s32.totalorder %s48, %s49
      %p58 = scmp.eq.s32.totalorder %s43, 0
      %p59 = por %p57, %p58
      %p60 = scmp.ne.s32.totalorder %s48, %s49
      %p61 = scmp.eq.s32.totalorder %s44, 1
      %p62 = por %p60, %p61
      %p64 = scmp.ne.s32.totalorder %s49, %s63
      %p65 = scmp.eq.s32.totalorder %s44, 0
      %p66 = por %p64, %p65
      %s68 = sadd.s32 %s67, 1
      %p71 = scmp.eq.s32.totalorder %s38, 1
      %p72 = scmp.ne.s32.totalorder %s67, %s69
      %p73 = scmp.eq.s32.totalorder %s38, 0
      %p74 = por %p72, %p73
      %p75 = scmp.ne.s32.totalorder %s67, %s69
      %p76 = scmp.eq.s32.totalorder %s43, 1
      %p77 = por %p75, %p76
      %p78 = scmp.ne.s32.totalorder %s69, %s70
      %p79 = scmp.eq.s32.totalorder %s43, 0
      %p80 = por %p78, %p79
      %p81 = scmp.ne.s32.totalorder %s69, %s70
      %p82 = scmp.eq.s32.totalorder %s44, 1
      %p83 = por %p81, %p82
      %p85 = scmp.ne.s32.totalorder %s70, %s84
      %p86 = scmp.eq.s32.totalorder %s44, 0
      %p87 = por %p85, %p86
      %s88 = ssub.s32 %s38, %s45
      %p89 = scmp.eq.s32.totalorder %s88, 0
      %s91 = sadd.s32 %s90, 1
      %s92 = scalar_select %p89, %s90, %s91
      %p95 = pneg %p89
      %p96 = scmp.eq.s32.totalorder %s38, 1
      %p97 = por %p95, %p96
      %p98 = scmp.ne.s32.totalorder %s90, %s93
      %p99 = scmp.eq.s32.totalorder %s38, 0
      %p100 = por %p98, %p99
      %p101 = scmp.ne.s32.totalorder %s90, %s93
      %p102 = scmp.eq.s32.totalorder %s43, 1
      %p103 = por %p101, %p102
      %p104 = scmp.ne.s32.totalorder %s93, %s94
      %p105 = scmp.eq.s32.totalorder %s43, 0
      %p106 = por %p104, %p105
      %p107 = scmp.ne.s32.totalorder %s93, %s94
      %p108 = scmp.eq.s32.totalorder %s44, 1
      %p109 = por %p107, %p108
      %p111 = scmp.ne.s32.totalorder %s94, %s110
      %p112 = scmp.eq.s32.totalorder %s44, 0
      %p113 = por %p111, %p112
      %s114 = ssub.s32 %s38, %s45
      %p115 = scmp.eq.s32.totalorder %s114, 0
      %s117 = sadd.s32 %s116, 1
      %s118 = scalar_select %p115, %s116, %s117
      %p121 = pneg %p115
      %p122 = scmp.eq.s32.totalorder %s38, 1
      %p123 = por %p121, %p122
      %p124 = scmp.ne.s32.totalorder %s116, %s119
      %p125 = scmp.eq.s32.totalorder %s38, 0
      %p126 = por %p124, %p125
      %p127 = scmp.ne.s32.totalorder %s116, %s119
      %p128 = scmp.eq.s32.totalorder %s43, 1
      %p129 = por %p127, %p128
      %p130 = scmp.ne.s32.totalorder %s119, %s120
      %p131 = scmp.eq.s32.totalorder %s43, 0
      %p132 = por %p130, %p131
      %p133 = scmp.ne.s32.totalorder %s119, %s120
      %p134 = scmp.eq.s32.totalorder %s44, 1
      %p135 = por %p133, %p134
      %p137 = scmp.ne.s32.totalorder %s120, %s136
      %p138 = scmp.eq.s32.totalorder %s44, 0
      %p139 = por %p137, %p138
      %s141 = sadd.s32 %s140, 1
      %p144 = scmp.eq.s32.totalorder %s38, 1
      %p145 = scmp.ne.s32.totalorder %s140, %s142
      %p146 = scmp.eq.s32.totalorder %s38, 0
      %p147 = por %p145, %p146
      %p148 = scmp.ne.s32.totalorder %s140, %s142
      %p149 = scmp.eq.s32.totalorder %s43, 1
      %p150 = por %p148, %p149
      %p151 = scmp.ne.s32.totalorder %s142, %s143
      %p152 = scmp.eq.s32.totalorder %s43, 0
      %p153 = por %p151, %p152
      %p154 = scmp.ne.s32.totalorder %s142, %s143
      %p155 = scmp.eq.s32.totalorder %s44, 1
      %p156 = por %p154, %p155
      %p158 = scmp.ne.s32.totalorder %s143, %s157
      %p159 = scmp.eq.s32.totalorder %s44, 0
      %p160 = por %p158, %p159
      %s162 = sadd.s32 %s161, 1
      %p165 = scmp.eq.s32.totalorder %s38, 1
      %p166 = scmp.ne.s32.totalorder %s161, %s163
      %p167 = scmp.eq.s32.totalorder %s38, 0
      %p168 = por %p166, %p167
      %p169 = scmp.ne.s32.totalorder %s161, %s163
      %p170 = scmp.eq.s32.totalorder %s43, 1
      %p171 = por %p169, %p170
      %p172 = scmp.ne.s32.totalorder %s163, %s164
      %p173 = scmp.eq.s32.totalorder %s43, 0
      %p174 = por %p172, %p173
      %p175 = scmp.ne.s32.totalorder %s163, %s164
      %p176 = scmp.eq.s32.totalorder %s44, 1
      %p177 = por %p175, %p176
      %p179 = scmp.ne.s32.totalorder %s164, %s178
      %p180 = scmp.eq.s32.totalorder %s44, 0
      %p181 = por %p179, %p180
      %s183 = sadd.s32 %s182, 1
      %p186 = scmp.eq.s32.totalorder %s38, 1
      %p187 = scmp.ne.s32.totalorder %s182, %s184
      %p188 = scmp.eq.s32.totalorder %s38, 0
      %p189 = por %p187, %p188
      %p190 = scmp.ne.s32.totalorder %s182, %s184
      %p191 = scmp.eq.s32.totalorder %s43, 1
      %p192 = por %p190, %p191
      %p193 = scmp.ne.s32.totalorder %s184, %s185
      %p194 = scmp.eq.s32.totalorder %s43, 0
      %p195 = por %p193, %p194
      %p196 = scmp.ne.s32.totalorder %s184, %s185
      %p197 = scmp.eq.s32.totalorder %s44, 1
      %p198 = por %p196, %p197
      %p200 = scmp.ne.s32.totalorder %s185, %s199
      %p201 = scmp.eq.s32.totalorder %s44, 0
      %p202 = por %p200, %p201
      %s203 = ssub.s32 %s38, %s45
      %p204 = scmp.eq.s32.totalorder %s203, 0
      %s206 = sadd.s32 %s205, 1
      %s207 = scalar_select %p204, %s205, %s206
      %p210 = pneg %p204
      %p211 = scmp.eq.s32.totalorder %s38, 1
      %p212 = por %p210, %p211
      %p213 = scmp.ne.s32.totalorder %s205, %s208
      %p214 = scmp.eq.s32.totalorder %s38, 0
      %p215 = por %p213, %p214
      %p216 = scmp.ne.s32.totalorder %s205, %s208
      %p217 = scmp.eq.s32.totalorder %s43, 1
      %p218 = por %p216, %p217
      %p219 = scmp.ne.s32.totalorder %s208, %s209
      %p220 = scmp.eq.s32.totalorder %s43, 0
      %p221 = por %p219, %p220
      %p222 = scmp.ne.s32.totalorder %s208, %s209
      %p223 = scmp.eq.s32.totalorder %s44, 1
      %p224 = por %p222, %p223
      %p226 = scmp.ne.s32.totalorder %s209, %s225
      %p227 = scmp.eq.s32.totalorder %s44, 0
      %p228 = por %p226, %p227
      %s229 = ssub.s32 %s38, %s45
      %p230 = scmp.eq.s32.totalorder %s229, 0
      %s232 = sadd.s32 %s231, 1
      %s233 = scalar_select %p230, %s231, %s232
      %p236 = pneg %p230
      %p237 = scmp.eq.s32.totalorder %s38, 1
      %p238 = por %p236, %p237
      %p239 = scmp.ne.s32.totalorder %s231, %s234
      %p240 = scmp.eq.s32.totalorder %s38, 0
      %p241 = por %p239, %p240
      %p242 = scmp.ne.s32.totalorder %s231, %s234
      %p243 = scmp.eq.s32.totalorder %s43, 1
      %p244 = por %p242, %p243
      %p245 = scmp.ne.s32.totalorder %s234, %s235
      %p246 = scmp.eq.s32.totalorder %s43, 0
      %p247 = por %p245, %p246
      %p248 = scmp.ne.s32.totalorder %s234, %s235
      %p249 = scmp.eq.s32.totalorder %s44, 1
      %p250 = por %p248, %p249
      %p252 = scmp.ne.s32.totalorder %s235, %s251
      %p253 = scmp.eq.s32.totalorder %s44, 0
      %p254 = por %p252, %p253
      %s255 = ssub.s32 %s38, %s45
      %p256 = scmp.eq.s32.totalorder %s255, 0
      %s258 = sadd.s32 %s257, 1
      %s259 = scalar_select %p256, %s257, %s258
      %p262 = pneg %p256
      %p263 = scmp.eq.s32.totalorder %s38, 1
      %p264 = por %p262, %p263
      %p265 = scmp.ne.s32.totalorder %s257, %s260
      %p266 = scmp.eq.s32.totalorder %s38, 0
      %p267 = por %p265, %p266
      %p268 = scmp.ne.s32.totalorder %s257, %s260
      %p269 = scmp.eq.s32.totalorder %s43, 1
      %p270 = por %p268, %p269
      %p271 = scmp.ne.s32.totalorder %s260, %s261
      %p272 = scmp.eq.s32.totalorder %s43, 0
      %p273 = por %p271, %p272
      %p274 = scmp.ne.s32.totalorder %s260, %s261
      %p275 = scmp.eq.s32.totalorder %s44, 1
      %p276 = por %p274, %p275
      %p278 = scmp.ne.s32.totalorder %s261, %s277
      %p279 = scmp.eq.s32.totalorder %s44, 0
      %p280 = por %p278, %p279
      %s281 = ssub.s32 %s38, %s45
      %p282 = scmp.eq.s32.totalorder %s281, 0
      %s284 = sadd.s32 %s283, 1
      %s285 = scalar_select %p282, %s283, %s284
      %p288 = pneg %p282
      %p289 = scmp.eq.s32.totalorder %s38, 1
      %p290 = por %p288, %p289
      %p291 = scmp.ne.s32.totalorder %s283, %s286
      %p292 = scmp.eq.s32.totalorder %s38, 0
      %p293 = por %p291, %p292
      %p294 = scmp.ne.s32.totalorder %s283, %s286
      %p295 = scmp.eq.s32.totalorder %s43, 1
      %p296 = por %p294, %p295
      %p297 = scmp.ne.s32.totalorder %s286, %s287
      %p298 = scmp.eq.s32.totalorder %s43, 0
      %p299 = por %p297, %p298
      %p300 = scmp.ne.s32.totalorder %s286, %s287
      %p301 = scmp.eq.s32.totalorder %s44, 1
      %p302 = por %p300, %p301
      %p304 = scmp.ne.s32.totalorder %s287, %s303
      %p305 = scmp.eq.s32.totalorder %s44, 0
      %p306 = por %p304, %p305
      %s307 = ssub.s32 %s38, %s45
      %p308 = scmp.eq.s32.totalorder %s307, 0
      %s310 = sadd.s32 %s309, 1
      %s311 = scalar_select %p308, %s309, %s310
      %p314 = pneg %p308
      %p315 = scmp.eq.s32.totalorder %s38, 1
      %p316 = por %p314, %p315
      %p317 = scmp.ne.s32.totalorder %s309, %s312
      %p318 = scmp.eq.s32.totalorder %s38, 0
      %p319 = por %p317, %p318
      %p320 = scmp.ne.s32.totalorder %s309, %s312
      %p321 = scmp.eq.s32.totalorder %s43, 1
      %p322 = por %p320, %p321
      %p323 = scmp.ne.s32.totalorder %s312, %s313
      %p324 = scmp.eq.s32.totalorder %s43, 0
      %p325 = por %p323, %p324
      %p326 = scmp.ne.s32.totalorder %s312, %s313
      %p327 = scmp.eq.s32.totalorder %s44, 1
      %p328 = por %p326, %p327
      %p330 = scmp.ne.s32.totalorder %s313, %s329
      %p331 = scmp.eq.s32.totalorder %s44, 0
      %p332 = por %p330, %p331
      %s333 = ssub.s32 %s38, %s45
      %p334 = scmp.eq.s32.totalorder %s333, 0
      %s336 = sadd.s32 %s335, 1
      %s337 = scalar_select %p334, %s335, %s336
      %p340 = pneg %p334
      %p341 = scmp.eq.s32.totalorder %s38, 1
      %p342 = por %p340, %p341
      %p343 = scmp.ne.s32.totalorder %s335, %s338
      %p344 = scmp.eq.s32.totalorder %s38, 0
      %p345 = por %p343, %p344
      %p346 = scmp.ne.s32.totalorder %s335, %s338
      %p347 = scmp.eq.s32.totalorder %s43, 1
      %p348 = por %p346, %p347
      %p349 = scmp.ne.s32.totalorder %s338, %s339
      %p350 = scmp.eq.s32.totalorder %s43, 0
      %p351 = por %p349, %p350
      %p352 = scmp.ne.s32.totalorder %s338, %s339
      %p353 = scmp.eq.s32.totalorder %s44, 1
      %p354 = por %p352, %p353
      %p356 = scmp.ne.s32.totalorder %s339, %s355
      %p357 = scmp.eq.s32.totalorder %s44, 0
      %p358 = por %p356, %p357
      %s359 = ssub.s32 %s38, %s45
      %p360 = scmp.eq.s32.totalorder %s359, 0
      %s362 = sadd.s32 %s361, 1
      %s363 = scalar_select %p360, %s361, %s362
      %p366 = pneg %p360
      %p367 = scmp.eq.s32.totalorder %s38, 1
      %p368 = por %p366, %p367
      %p369 = scmp.ne.s32.totalorder %s361, %s364
      %p370 = scmp.eq.s32.totalorder %s38, 0
      %p371 = por %p369, %p370
      %p372 = scmp.ne.s32.totalorder %s361, %s364
      %p373 = scmp.eq.s32.totalorder %s43, 1
      %p374 = por %p372, %p373
      %p375 = scmp.ne.s32.totalorder %s364, %s365
      %p376 = scmp.eq.s32.totalorder %s43, 0
      %p377 = por %p375, %p376
      %p378 = scmp.ne.s32.totalorder %s364, %s365
      %p379 = scmp.eq.s32.totalorder %s44, 1
      %p380 = por %p378, %p379
      %p382 = scmp.ne.s32.totalorder %s365, %s381
      %p383 = scmp.eq.s32.totalorder %s44, 0
      %p384 = por %p382, %p383
      %s385 = ssub.s32 %s38, %s45
      %p386 = scmp.eq.s32.totalorder %s385, 0
      %s388 = sadd.s32 %s387, 1
      %s389 = scalar_select %p386, %s387, %s388
      %p392 = pneg %p386
      %p393 = scmp.eq.s32.totalorder %s38, 1
      %p394 = por %p392, %p393
      %p395 = scmp.ne.s32.totalorder %s387, %s390
      %p396 = scmp.eq.s32.totalorder %s38, 0
      %p397 = por %p395, %p396
      %p398 = scmp.ne.s32.totalorder %s387, %s390
      %p399 = scmp.eq.s32.totalorder %s43, 1
      %p400 = por %p398, %p399
      %p401 = scmp.ne.s32.totalorder %s390, %s391
      %p402 = scmp.eq.s32.totalorder %s43, 0
      %p403 = por %p401, %p402
      %p404 = scmp.ne.s32.totalorder %s390, %s391
      %p405 = scmp.eq.s32.totalorder %s44, 1
      %p406 = por %p404, %p405
      %p408 = scmp.ne.s32.totalorder %s391, %s407
      %p409 = scmp.eq.s32.totalorder %s44, 0
      %p410 = por %p408, %p409
      %s412 = sadd.s32 %s411, 1
      %p415 = scmp.eq.s32.totalorder %s38, 1
      %p416 = scmp.ne.s32.totalorder %s411, %s413
      %p417 = scmp.eq.s32.totalorder %s38, 0
      %p418 = por %p416, %p417
      %p419 = scmp.ne.s32.totalorder %s411, %s413
      %p420 = scmp.eq.s32.totalorder %s43, 1
      %p421 = por %p419, %p420
      %p422 = scmp.ne.s32.totalorder %s413, %s414
      %p423 = scmp.eq.s32.totalorder %s43, 0
      %p424 = por %p422, %p423
      %p425 = scmp.ne.s32.totalorder %s413, %s414
      %p426 = scmp.eq.s32.totalorder %s44, 1
      %p427 = por %p425, %p426
      %p429 = scmp.ne.s32.totalorder %s414, %s428
      %p430 = scmp.eq.s32.totalorder %s44, 0
      %p431 = por %p429, %p430
      %s433 = sadd.s32 %s432, 1
      %p436 = scmp.eq.s32.totalorder %s38, 1
      %p437 = scmp.ne.s32.totalorder %s432, %s434
      %p438 = scmp.eq.s32.totalorder %s38, 0
      %p439 = por %p437, %p438
      %p440 = scmp.ne.s32.totalorder %s432, %s434
      %p441 = scmp.eq.s32.totalorder %s43, 1
      %p442 = por %p440, %p441
      %p443 = scmp.ne.s32.totalorder %s434, %s435
      %p444 = scmp.eq.s32.totalorder %s43, 0
      %p445 = por %p443, %p444
      %p446 = scmp.ne.s32.totalorder %s434, %s435
      %p447 = scmp.eq.s32.totalorder %s44, 1
      %p448 = por %p446, %p447
      %p450 = scmp.ne.s32.totalorder %s435, %s449
      %p451 = scmp.eq.s32.totalorder %s44, 0
      %p452 = por %p450, %p451
      %s453 = ssub.s32 %s38, %s45
      %p454 = scmp.eq.s32.totalorder %s453, 0
      %s456 = sadd.s32 %s455, 1
      %s457 = scalar_select %p454, %s455, %s456
      %p460 = pneg %p454
      %p461 = scmp.eq.s32.totalorder %s38, 1
      %p462 = por %p460, %p461
      %p463 = scmp.ne.s32.totalorder %s455, %s458
      %p464 = scmp.eq.s32.totalorder %s38, 0
      %p465 = por %p463, %p464
      %p466 = scmp.ne.s32.totalorder %s455, %s458
      %p467 = scmp.eq.s32.totalorder %s43, 1
      %p468 = por %p466, %p467
      %p469 = scmp.ne.s32.totalorder %s458, %s459
      %p470 = scmp.eq.s32.totalorder %s43, 0
      %p471 = por %p469, %p470
      %p472 = scmp.ne.s32.totalorder %s458, %s459
      %p473 = scmp.eq.s32.totalorder %s44, 1
      %p474 = por %p472, %p473
      %p476 = scmp.ne.s32.totalorder %s459, %s475
      %p477 = scmp.eq.s32.totalorder %s44, 0
      %p478 = por %p476, %p477
      %s479 = ssub.s32 %s38, %s45
      %p480 = scmp.eq.s32.totalorder %s479, 0
      %s482 = sadd.s32 %s481, 1
      %s483 = scalar_select %p480, %s481, %s482
      %p486 = pneg %p480
      %p487 = scmp.eq.s32.totalorder %s38, 1
      %p488 = por %p486, %p487
      %p489 = scmp.ne.s32.totalorder %s481, %s484
      %p490 = scmp.eq.s32.totalorder %s38, 0
      %p491 = por %p489, %p490
      %p492 = scmp.ne.s32.totalorder %s481, %s484
      %p493 = scmp.eq.s32.totalorder %s43, 1
      %p494 = por %p492, %p493
      %p495 = scmp.ne.s32.totalorder %s484, %s485
      %p496 = scmp.eq.s32.totalorder %s43, 0
      %p497 = por %p495, %p496
      %p498 = scmp.ne.s32.totalorder %s484, %s485
      %p499 = scmp.eq.s32.totalorder %s44, 1
      %p500 = por %p498, %p499
      %p502 = scmp.ne.s32.totalorder %s485, %s501
      %p503 = scmp.eq.s32.totalorder %s44, 0
      %p504 = por %p502, %p503
      %p505 = scmp.le.s32.totalorder 1, %s38
      %p506 = scmp.lt.s32.totalorder %s38, 3
      %p507 = pnand %p505, %p506
      %p508 = pneg %p507
      // Predicated region
      $region9: #{multi_layer_recurrent_gn.1} parent=5 // pred_check
        _
      $region10: #{multi_layer_recurrent_gn.1} parent=5 // pred_check_branch
        %510 = sbr.rel (%p507) target = $region12
      $region11: #{multi_layer_recurrent_gn.1} parent=5 // pred_region
        %s511 = ssub.s32 %s38, 1
        // Predicated region
        $region13: #{multi_layer_recurrent_gn.1} parent=11 // pred_check
          %p512 = pneg %p59
        $region14: #{multi_layer_recurrent_gn.1} parent=11 // pred_check_branch
          %514 = sbr.rel (%p512) target = $region16
        $region15: #{multi_layer_recurrent_gn.1} parent=11 // pred_region
          %516 = vsyncadd [#allocation3], 0
          %s517 = sshll.u32 %s0, 4
          %s518 = int_to_ptr.hbm [resolvable:$true] %s517
          %s519 = sshll.u32 [#allocation2], 4
          %s520 = int_to_ptr.vmem [resolvable:$true] %s519
          %525 = dma.hbm_to_vmem [thread:$0]  %s518, 256, %s520, [#allocation3], 128, 128, 8
        $region16: #{multi_layer_recurrent_gn.1} parent=11 // pred_fallthru
          _
        // Predicated region
        $region17: #{multi_layer_recurrent_gn.1} parent=11 // pred_check
          %p526 = pneg %p80
        $region18: #{multi_layer_recurrent_gn.1} parent=11 // pred_check_branch
          %528 = sbr.rel (%p526) target = $region20
        $region19: #{multi_layer_recurrent_gn.1} parent=11 // pred_region
          %530 = vsyncadd [#allocation6], 0
          %s531 = sshll.u32 %s1, 4
          %s532 = int_to_ptr.hbm [resolvable:$true] %s531
          %s533 = sshll.u32 [#allocation5], 4
          %s534 = int_to_ptr.vmem [resolvable:$true] %s533
          %539 = dma.hbm_to_vmem [thread:$0]  %s532, 512, %s534, [#allocation6], 128, 128, 8
        $region20: #{multi_layer_recurrent_gn.1} parent=11 // pred_fallthru
          _
        // Predicated region
        $region21: #{multi_layer_recurrent_gn.1} parent=11 // pred_check
          %p540 = pneg %p153
        $region22: #{multi_layer_recurrent_gn.1} parent=11 // pred_check_branch
          %542 = sbr.rel (%p540) target = $region24
        $region23: #{multi_layer_recurrent_gn.1} parent=11 // pred_region
          _
        $region24: #{multi_layer_recurrent_gn.1} parent=11 // pred_fallthru
          _
        // Predicated region
        $region25: #{multi_layer_recurrent_gn.1} parent=11 // pred_check
          %p543 = pneg %p174
        $region26: #{multi_layer_recurrent_gn.1} parent=11 // pred_check_branch
          %545 = sbr.rel (%p543) target = $region28
        $region27: #{multi_layer_recurrent_gn.1} parent=11 // pred_region
          _
        $region28: #{multi_layer_recurrent_gn.1} parent=11 // pred_fallthru
          _
        // Predicated region
        $region29: #{multi_layer_recurrent_gn.1} parent=11 // pred_check
          %p546 = pneg %p195
        $region30: #{multi_layer_recurrent_gn.1} parent=11 // pred_check_branch
          %548 = sbr.rel (%p546) target = $region32
        $region31: #{multi_layer_recurrent_gn.1} parent=11 // pred_region
          %550 = vsyncadd [#allocation6], 0
          %s551 = sshll.u32 %s6, 4
          %s552 = int_to_ptr.hbm [resolvable:$true] %s551
          %s553 = sshll.u32 [#allocation9], 4
          %s554 = int_to_ptr.vmem [resolvable:$true] %s553
          %559 = dma.hbm_to_vmem [thread:$0]  %s552, 256, %s554, [#allocation6], 128, 128, 8
        $region32: #{multi_layer_recurrent_gn.1} parent=11 // pred_fallthru
          _
      $region12: #{multi_layer_recurrent_gn.1} parent=5 // pred_fallthru
        _
      %p560 = scmp.lt.s32.totalorder %s38, 2
      // Predicated region
      $region33: #{multi_layer_recurrent_gn.1} parent=5 // pred_check
        %p561 = pneg %p560
      $region34: #{multi_layer_recurrent_gn.1} parent=5 // pred_check_branch
        %563 = sbr.rel (%p561) target = $region36
      $region35: #{multi_layer_recurrent_gn.1} parent=5 // pred_region
        // Predicated region
        $region37: #{multi_layer_recurrent_gn.1} parent=35 // pred_check
          %p564 = pneg %p100
        $region38: #{multi_layer_recurrent_gn.1} parent=35 // pred_check_branch
          %566 = sbr.rel (%p564) target = $region40
        $region39: #{multi_layer_recurrent_gn.1} parent=35 // pred_region
          %s567 = sand.u32 %s38, 1
          %s568 = scalar_lea.sflag [#allocation3], %s567
          %s569 = sand.u32 %s90, 1
          %s570 = smul.addr %s569, 16
          %s571 = scalar_lea.vmem [#allocation7], %s570
          %573 = vsyncadd %s568, 0
          %s574 = smul.addr %s38, 2
          %s575 = smul.addr %s574, 8
          %s576 = scalar_lea.hbm %s2, %s575
          %s577 = sshll.u32 %s576, 4
          %s578 = int_to_ptr.hbm [resolvable:$true] %s577
          %s579 = sshll.u32 %s571, 4
          %s580 = int_to_ptr.vmem [resolvable:$true] %s579
          %585 = dma.hbm_to_vmem [thread:$0]  %s578, 256, %s580, %s568, 128, 128, 8
        $region40: #{multi_layer_recurrent_gn.1} parent=35 // pred_fallthru
          _
        // Predicated region
        $region41: #{multi_layer_recurrent_gn.1} parent=35 // pred_check
          %p586 = pneg %p126
        $region42: #{multi_layer_recurrent_gn.1} parent=35 // pred_check_branch
          %588 = sbr.rel (%p586) target = $region44
        $region43: #{multi_layer_recurrent_gn.1} parent=35 // pred_region
          %s589 = sand.u32 %s38, 1
          %s590 = scalar_lea.sflag [#allocation3], %s589
          %s591 = sand.u32 %s116, 1
          %s592 = smul.addr %s591, 32
          %s593 = scalar_lea.vmem [#allocation8], %s592
          %595 = vsyncadd %s590, 0
          %s596 = smul.addr %s38, 4
          %s597 = smul.addr %s596, 8
          %s598 = scalar_lea.hbm %s3, %s597
          %s599 = sshll.u32 %s598, 4
          %s600 = int_to_ptr.hbm [resolvable:$true] %s599
          %s601 = sshll.u32 %s593, 4
          %s602 = int_to_ptr.vmem [resolvable:$true] %s601
          %607 = dma.hbm_to_vmem [thread:$0]  %s600, 512, %s602, %s590, 128, 128, 8
        $region44: #{multi_layer_recurrent_gn.1} parent=35 // pred_fallthru
          _
        // Predicated region
        $region45: #{multi_layer_recurrent_gn.1} parent=35 // pred_check
          %p608 = pneg %p215
        $region46: #{multi_layer_recurrent_gn.1} parent=35 // pred_check_branch
          %610 = sbr.rel (%p608) target = $region48
        $region47: #{multi_layer_recurrent_gn.1} parent=35 // pred_region
          %p611 = scmp.lt.s32.totalorder %s38, 1
          %s612 = scalar_select %p611, %s38, 1
          %s613 = smul.addr %s612, 12
          %s614 = smul.addr %s613, 4
          %s615 = scalar_lea.vmem %s7, %s614
        $region48: #{multi_layer_recurrent_gn.1} parent=35 // pred_fallthru
          _
        // Predicated region
        $region49: #{multi_layer_recurrent_gn.1} parent=35 // pred_check
          %p616 = pneg %p241
        $region50: #{multi_layer_recurrent_gn.1} parent=35 // pred_check_branch
          %618 = sbr.rel (%p616) target = $region52
        $region51: #{multi_layer_recurrent_gn.1} parent=35 // pred_region
          %s619 = sand.u32 %s38, 1
          %s620 = scalar_lea.sflag [#allocation11], %s619
          %s621 = sand.u32 %s231, 1
          %s622 = smul.addr %s621, 16
          %s623 = scalar_lea.vmem [#allocation10], %s622
          %625 = vsyncadd %s620, 0
          %s626 = smul.addr %s38, 4
          %s627 = smul.addr %s626, 4
          %s628 = scalar_lea.hbm %s8, %s627
          %s629 = sshll.u32 %s628, 4
          %s630 = int_to_ptr.hbm [resolvable:$true] %s629
          %s631 = sshll.u32 %s623, 4
          %s632 = int_to_ptr.vmem [resolvable:$true] %s631
          %637 = dma.hbm_to_vmem [thread:$0]  %s630, 256, %s632, %s620, 64, 64, 4
        $region52: #{multi_layer_recurrent_gn.1} parent=35 // pred_fallthru
          _
        // Predicated region
        $region53: #{multi_layer_recurrent_gn.1} parent=35 // pred_check
          %p638 = pneg %p267
        $region54: #{multi_layer_recurrent_gn.1} parent=35 // pred_check_branch
          %640 = sbr.rel (%p638) target = $region56
        $region55: #{multi_layer_recurrent_gn.1} parent=35 // pred_region
          %p641 = scmp.lt.s32.totalorder %s38, 1
          %s642 = scalar_select %p641, %s38, 1
          %s643 = scalar_lea.vmem %s9, %s642
        $region56: #{multi_layer_recurrent_gn.1} parent=35 // pred_fallthru
          _
        // Predicated region
        $region57: #{multi_layer_recurrent_gn.1} parent=35 // pred_check
          %p644 = pneg %p293
        $region58: #{multi_layer_recurrent_gn.1} parent=35 // pred_check_branch
          %646 = sbr.rel (%p644) target = $region60
        $region59: #{multi_layer_recurrent_gn.1} parent=35 // pred_region
          %p647 = scmp.lt.s32.totalorder %s38, 1
          %s648 = scalar_select %p647, %s38, 1
          %s649 = scalar_lea.vmem %s10, %s648
        $region60: #{multi_layer_recurrent_gn.1} parent=35 // pred_fallthru
          _
        // Predicated region
        $region61: #{multi_layer_recurrent_gn.1} parent=35 // pred_check
          %p650 = pneg %p319
        $region62: #{multi_layer_recurrent_gn.1} parent=35 // pred_check_branch
          %652 = sbr.rel (%p650) target = $region64
        $region63: #{multi_layer_recurrent_gn.1} parent=35 // pred_region
          %s653 = sand.u32 %s38, 1
          %s654 = scalar_lea.sflag [#allocation11], %s653
          %s655 = sand.u32 %s309, 1
          %s656 = smul.addr %s655, 32
          %s657 = scalar_lea.vmem [#allocation12], %s656
          %659 = vsyncadd %s654, 0
          %s660 = smul.addr %s38, 8
          %s661 = smul.addr %s660, 4
          %s662 = scalar_lea.hbm %s11, %s661
          %s663 = sshll.u32 %s662, 4
          %s664 = int_to_ptr.hbm [resolvable:$true] %s663
          %s665 = sshll.u32 %s657, 4
          %s666 = int_to_ptr.vmem [resolvable:$true] %s665
          %671 = dma.hbm_to_vmem [thread:$0]  %s664, 512, %s666, %s654, 64, 64, 4
        $region64: #{multi_layer_recurrent_gn.1} parent=35 // pred_fallthru
          _
        // Predicated region
        $region65: #{multi_layer_recurrent_gn.1} parent=35 // pred_check
          %p672 = pneg %p345
        $region66: #{multi_layer_recurrent_gn.1} parent=35 // pred_check_branch
          %674 = sbr.rel (%p672) target = $region68
        $region67: #{multi_layer_recurrent_gn.1} parent=35 // pred_region
          %s675 = sand.u32 %s38, 1
          %s676 = scalar_lea.sflag [#allocation14], %s675
          %s677 = sand.u32 %s335, 1
          %s678 = smul.addr %s677, 16
          %s679 = scalar_lea.vmem [#allocation13], %s678
          %681 = vsyncadd %s676, 0
          %s682 = smul.addr %s38, 4
          %s683 = smul.addr %s682, 4
          %s684 = scalar_lea.hbm %s12, %s683
          %s685 = sshll.u32 %s684, 4
          %s686 = int_to_ptr.hbm [resolvable:$true] %s685
          %s687 = sshll.u32 %s679, 4
          %s688 = int_to_ptr.vmem [resolvable:$true] %s687
          %693 = dma.hbm_to_vmem [thread:$0]  %s686, 256, %s688, %s676, 64, 64, 4
        $region68: #{multi_layer_recurrent_gn.1} parent=35 // pred_fallthru
          _
        // Predicated region
        $region69: #{multi_layer_recurrent_gn.1} parent=35 // pred_check
          %p694 = pneg %p371
        $region70: #{multi_layer_recurrent_gn.1} parent=35 // pred_check_branch
          %696 = sbr.rel (%p694) target = $region72
        $region71: #{multi_layer_recurrent_gn.1} parent=35 // pred_region
          %s697 = sand.u32 %s38, 1
          %s698 = scalar_lea.sflag [#allocation14], %s697
          %s699 = sand.u32 %s361, 1
          %s700 = scalar_lea.vmem [#allocation15], %s699
          %702 = vsyncadd %s698, 0
          %s703 = scalar_lea.hbm %s13, %s38
          %s705 = sshll.u32 %s703, 4
          %s706 = int_to_ptr.hbm [resolvable:$true] %s705
          %s707 = sshll.u32 %s700, 4
          %s708 = int_to_ptr.vmem [resolvable:$true] %s707
          %710 = dma.hbm_to_vmem [thread:$0]  %s706, 16, %s708, %s698
        $region72: #{multi_layer_recurrent_gn.1} parent=35 // pred_fallthru
          _
        // Predicated region
        $region73: #{multi_layer_recurrent_gn.1} parent=35 // pred_check
          %p711 = pneg %p397
        $region74: #{multi_layer_recurrent_gn.1} parent=35 // pred_check_branch
          %713 = sbr.rel (%p711) target = $region76
        $region75: #{multi_layer_recurrent_gn.1} parent=35 // pred_region
          %s714 = sand.u32 %s387, 1
          %s715 = scalar_lea.sflag [#allocation17], %s714
          %s716 = sand.u32 %s387, 1
          %s717 = scalar_lea.vmem [#allocation16], %s716
          %719 = vsyncadd %s715, 0
          %s720 = scalar_lea.hbm %s14, %s38
          %s722 = sshll.u32 %s720, 4
          %s723 = int_to_ptr.hbm [resolvable:$true] %s722
          %s724 = sshll.u32 %s717, 4
          %s725 = int_to_ptr.vmem [resolvable:$true] %s724
          %727 = dma.hbm_to_vmem [thread:$0]  %s723, 16, %s725, %s715
        $region76: #{multi_layer_recurrent_gn.1} parent=35 // pred_fallthru
          _
      $region36: #{multi_layer_recurrent_gn.1} parent=5 // pred_fallthru
        _
      %p728 = scmp.le.s32.totalorder 1, %s38
      %p729 = scmp.lt.s32.totalorder %s38, 3
      %p730 = pnand %p728, %p729
      %p731 = pneg %p730
      // Predicated region
      $region77: #{multi_layer_recurrent_gn.1} parent=5 // pred_check
        _
      $region78: #{multi_layer_recurrent_gn.1} parent=5 // pred_check_branch
        %733 = sbr.rel (%p730) target = $region80
      $region79: #{multi_layer_recurrent_gn.1} parent=5 // pred_region
        %s734 = ssub.s32 %s38, 1
        // Predicated region
        $region81: #{multi_layer_recurrent_gn.1} parent=79 // pred_check
          %p735 = pneg %p59
        $region82: #{multi_layer_recurrent_gn.1} parent=79 // pred_check_branch
          %737 = sbr.rel (%p735) target = $region84
        $region83: #{multi_layer_recurrent_gn.1} parent=79 // pred_region
          %739 = dma.done [#allocation3], 256
        $region84: #{multi_layer_recurrent_gn.1} parent=79 // pred_fallthru
          _
        // Predicated region
        $region85: #{multi_layer_recurrent_gn.1} parent=79 // pred_check
          %p740 = pneg %p80
        $region86: #{multi_layer_recurrent_gn.1} parent=79 // pred_check_branch
          %742 = sbr.rel (%p740) target = $region88
        $region87: #{multi_layer_recurrent_gn.1} parent=79 // pred_region
          %744 = dma.done [#allocation6], 512
        $region88: #{multi_layer_recurrent_gn.1} parent=79 // pred_fallthru
          _
        %s745 = sand.u32 %s43, 1
        %s746 = scalar_lea.sflag [#allocation3], %s745
        %s747 = sand.u32 %s93, 1
        %s748 = smul.addr %s747, 16
        %s749 = scalar_lea.vmem [#allocation7], %s748
        // Predicated region
        $region89: #{multi_layer_recurrent_gn.1} parent=79 // pred_check
          %p750 = pneg %p106
        $region90: #{multi_layer_recurrent_gn.1} parent=79 // pred_check_branch
          %752 = sbr.rel (%p750) target = $region92
        $region91: #{multi_layer_recurrent_gn.1} parent=79 // pred_region
          %754 = dma.done %s746, 256
        $region92: #{multi_layer_recurrent_gn.1} parent=79 // pred_fallthru
          _
        %s755 = sand.u32 %s43, 1
        %s756 = scalar_lea.sflag [#allocation3], %s755
        %s757 = sand.u32 %s119, 1
        %s758 = smul.addr %s757, 32
        %s759 = scalar_lea.vmem [#allocation8], %s758
        // Predicated region
        $region93: #{multi_layer_recurrent_gn.1} parent=79 // pred_check
          %p760 = pneg %p132
        $region94: #{multi_layer_recurrent_gn.1} parent=79 // pred_check_branch
          %762 = sbr.rel (%p760) target = $region96
        $region95: #{multi_layer_recurrent_gn.1} parent=79 // pred_region
          %764 = dma.done %s756, 512
        $region96: #{multi_layer_recurrent_gn.1} parent=79 // pred_fallthru
          _
        // Predicated region
        $region97: #{multi_layer_recurrent_gn.1} parent=79 // pred_check
          %p765 = pneg %p195
        $region98: #{multi_layer_recurrent_gn.1} parent=79 // pred_check_branch
          %767 = sbr.rel (%p765) target = $region100
        $region99: #{multi_layer_recurrent_gn.1} parent=79 // pred_region
          %769 = dma.done [#allocation6], 256
        $region100: #{multi_layer_recurrent_gn.1} parent=79 // pred_fallthru
          _
        %s770 = sand.u32 %s43, 1
        %s771 = scalar_lea.sflag [#allocation11], %s770
        %s772 = sand.u32 %s234, 1
        %s773 = smul.addr %s772, 16
        %s774 = scalar_lea.vmem [#allocation10], %s773
        // Predicated region
        $region101: #{multi_layer_recurrent_gn.1} parent=79 // pred_check
          %p775 = pneg %p247
        $region102: #{multi_layer_recurrent_gn.1} parent=79 // pred_check_branch
          %777 = sbr.rel (%p775) target = $region104
        $region103: #{multi_layer_recurrent_gn.1} parent=79 // pred_region
          %779 = dma.done %s771, 256
        $region104: #{multi_layer_recurrent_gn.1} parent=79 // pred_fallthru
          _
        %s780 = sand.u32 %s43, 1
        %s781 = scalar_lea.sflag [#allocation11], %s780
        %s782 = sand.u32 %s312, 1
        %s783 = smul.addr %s782, 32
        %s784 = scalar_lea.vmem [#allocation12], %s783
        // Predicated region
        $region105: #{multi_layer_recurrent_gn.1} parent=79 // pred_check
          %p785 = pneg %p325
        $region106: #{multi_layer_recurrent_gn.1} parent=79 // pred_check_branch
          %787 = sbr.rel (%p785) target = $region108
        $region107: #{multi_layer_recurrent_gn.1} parent=79 // pred_region
          %789 = dma.done %s781, 512
        $region108: #{multi_layer_recurrent_gn.1} parent=79 // pred_fallthru
          _
        %s790 = sand.u32 %s43, 1
        %s791 = scalar_lea.sflag [#allocation14], %s790
        %s792 = sand.u32 %s338, 1
        %s793 = smul.addr %s792, 16
        %s794 = scalar_lea.vmem [#allocation13], %s793
        // Predicated region
        $region109: #{multi_layer_recurrent_gn.1} parent=79 // pred_check
          %p795 = pneg %p351
        $region110: #{multi_layer_recurrent_gn.1} parent=79 // pred_check_branch
          %797 = sbr.rel (%p795) target = $region112
        $region111: #{multi_layer_recurrent_gn.1} parent=79 // pred_region
          %799 = dma.done %s791, 256
        $region112: #{multi_layer_recurrent_gn.1} parent=79 // pred_fallthru
          _
        %s800 = sand.u32 %s43, 1
        %s801 = scalar_lea.sflag [#allocation14], %s800
        %s802 = sand.u32 %s364, 1
        %s803 = scalar_lea.vmem [#allocation15], %s802
        // Predicated region
        $region113: #{multi_layer_recurrent_gn.1} parent=79 // pred_check
          %p804 = pneg %p377
        $region114: #{multi_layer_recurrent_gn.1} parent=79 // pred_check_branch
          %806 = sbr.rel (%p804) target = $region116
        $region115: #{multi_layer_recurrent_gn.1} parent=79 // pred_region
          %808 = dma.done %s801, 16
        $region116: #{multi_layer_recurrent_gn.1} parent=79 // pred_fallthru
          _
        %s809 = sand.u32 %s390, 1
        %s810 = scalar_lea.sflag [#allocation17], %s809
        %s811 = sand.u32 %s390, 1
        %s812 = scalar_lea.vmem [#allocation16], %s811
        // Predicated region
        $region117: #{multi_layer_recurrent_gn.1} parent=79 // pred_check
          %p813 = pneg %p403
        $region118: #{multi_layer_recurrent_gn.1} parent=79 // pred_check_branch
          %815 = sbr.rel (%p813) target = $region120
        $region119: #{multi_layer_recurrent_gn.1} parent=79 // pred_region
          %817 = dma.done %s810, 16
        $region120: #{multi_layer_recurrent_gn.1} parent=79 // pred_fallthru
          _
        %p818 = pneg %p59
        %p819 = pneg %p56
        %p820 = pneg %p80
        %p821 = pneg %p77
        %s822 = sand.u32 %s43, 1
        %s823 = scalar_lea.sflag [#allocation3], %s822
        %s824 = sand.u32 %s93, 1
        %s825 = smul.addr %s824, 16
        %s826 = scalar_lea.vmem [#allocation7], %s825
        %p827 = pneg %p106
        %p828 = pneg %p103
        %s829 = sand.u32 %s43, 1
        %s830 = scalar_lea.sflag [#allocation3], %s829
        %s831 = sand.u32 %s119, 1
        %s832 = smul.addr %s831, 32
        %s833 = scalar_lea.vmem [#allocation8], %s832
        %p834 = pneg %p132
        %p835 = pneg %p129
        %p836 = pneg %p153
        %p837 = pneg %p150
        %p838 = pneg %p174
        %p839 = pneg %p171
        %p840 = pneg %p195
        %p841 = pneg %p192
        %p842 = scmp.lt.s32.totalorder %s43, 1
        %s843 = scalar_select %p842, %s43, 1
        %s844 = smul.addr %s843, 12
        %s845 = smul.addr %s844, 4
        %s846 = scalar_lea.vmem %s7, %s845
        %p847 = pneg %p221
        %p848 = pneg %p218
        %s849 = sand.u32 %s43, 1
        %s850 = scalar_lea.sflag [#allocation11], %s849
        %s851 = sand.u32 %s234, 1
        %s852 = smul.addr %s851, 16
        %s853 = scalar_lea.vmem [#allocation10], %s852
        %p854 = pneg %p247
        %p855 = pneg %p244
        %p856 = scmp.lt.s32.totalorder %s43, 1
        %s857 = scalar_select %p856, %s43, 1
        %s858 = scalar_lea.vmem %s9, %s857
        %p859 = pneg %p273
        %p860 = pneg %p270
        %p861 = scmp.lt.s32.totalorder %s43, 1
        %s862 = scalar_select %p861, %s43, 1
        %s863 = scalar_lea.vmem %s10, %s862
        %p864 = pneg %p299
        %p865 = pneg %p296
        %s866 = sand.u32 %s43, 1
        %s867 = scalar_lea.sflag [#allocation11], %s866
        %s868 = sand.u32 %s312, 1
        %s869 = smul.addr %s868, 32
        %s870 = scalar_lea.vmem [#allocation12], %s869
        %p871 = pneg %p325
        %p872 = pneg %p322
        %s873 = sand.u32 %s43, 1
        %s874 = scalar_lea.sflag [#allocation14], %s873
        %s875 = sand.u32 %s338, 1
        %s876 = smul.addr %s875, 16
        %s877 = scalar_lea.vmem [#allocation13], %s876
        %p878 = pneg %p351
        %p879 = pneg %p348
        %s880 = sand.u32 %s43, 1
        %s881 = scalar_lea.sflag [#allocation14], %s880
        %s882 = sand.u32 %s364, 1
        %s883 = scalar_lea.vmem [#allocation15], %s882
        %p884 = pneg %p377
        %p885 = pneg %p374
        %s886 = sand.u32 %s390, 1
        %s887 = scalar_lea.sflag [#allocation17], %s886
        %s888 = sand.u32 %s390, 1
        %s889 = scalar_lea.vmem [#allocation16], %s888
        %p890 = pneg %p403
        %p891 = pneg %p400
        %p892 = pneg %p424
        %p893 = pneg %p421
        %p894 = pneg %p445
        %p895 = pneg %p442
        %p896 = pneg %p471
        %p897 = pneg %p468
        %s898 = sand.u32 %s43, 1
        %s899 = scalar_lea.sflag [#allocation4], %s898
        %s900 = sand.u32 %s458, 1
        %s901 = smul.addr %s900, 16
        %s902 = scalar_lea.vmem [#allocation21], %s901
        %p903 = pneg %p497
        %p904 = pneg %p494
        %s905 = sand.u32 %s43, 1
        %s906 = scalar_lea.sflag [#allocation4], %s905
        %s907 = sand.u32 %s484, 1
        %s908 = smul.addr %s907, 32
        %s909 = scalar_lea.vmem [#allocation22], %s908
        %p910 = scmp.lt.s32.totalorder %s43, 1
        %s911 = scalar_select %p910, %s43, 1
        %s912 = smul.addr %s911, 12
        %s913 = smul.addr %s912, 4
        %s914 = scalar_lea.vmem %s7, %s913
        %p915 = scmp.lt.s32.totalorder %s43, 1
        %s916 = scalar_select %p915, %s43, 1
        %s917 = scalar_lea.vmem %s9, %s916
        %p918 = scmp.lt.s32.totalorder %s43, 1
        %s919 = scalar_select %p918, %s43, 1
        %s920 = scalar_lea.vmem %s10, %s919
        %p922 = scmp.eq.s32.totalorder %s43, 0
        // Predicated region
        $region121: #{multi_layer_recurrent_gn.1} parent=79 // pred_check
          %p923 = pneg %p922
        $region122: #{multi_layer_recurrent_gn.1} parent=79 // pred_check_branch
          %925 = sbr.rel (%p923) target = $region124
        $region123: #{multi_layer_recurrent_gn.1} parent=79 // pred_region
          %v926 = vld [vmem:[#allocation2] sm:$0xff]
          %v927 = vld [vmem:[#allocation2 + $0x8] sm:$0xff]
          %vm928 = vcmask 261120
          %929 = vst.msk [vmem:[#allocation18] sm:$0xff] %vm928, %v926
          %930 = vst.msk [vmem:[#allocation18 + $0x8] sm:$0xff] %vm928, %v927
          %v931 = vld [vmem:[#allocation5] sm:$0xff]
          %v932 = vld [vmem:[#allocation5 + $0x8] sm:$0xff]
          %v933 = vld [vmem:[#allocation5 + $0x10] sm:$0xff]
          %v934 = vld [vmem:[#allocation5 + $0x18] sm:$0xff]
          %935 = vst.msk [vmem:[#allocation19] sm:$0xff] %vm928, %v931
          %936 = vst.msk [vmem:[#allocation19 + $0x8] sm:$0xff] %vm928, %v932
          %937 = vst.msk [vmem:[#allocation19 + $0x10] sm:$0xff] %vm928, %v933
          %938 = vst.msk [vmem:[#allocation19 + $0x18] sm:$0xff] %vm928, %v934
        $region124: #{multi_layer_recurrent_gn.1} parent=79 // pred_fallthru
          _
        %v939 = vld [vmem:[#allocation18] sm:$0xff]
        %v940 = vld [vmem:[#allocation18 + $0x8] sm:$0xff]
        %v941 = vld [vmem:[#allocation19] sm:$0xff]
        %v942 = vld [vmem:[#allocation19 + $0x8] sm:$0xff]
        %v943 = vld [vmem:[#allocation19 + $0x10] sm:$0xff]
        %v944 = vld [vmem:[#allocation19 + $0x18] sm:$0xff]
        %v945 = vld [vmem:[%s749] sm:$0xff]
        %v946 = vld [vmem:[%s749 + $0x8] sm:$0xff]
        %v947 = vld [vmem:[%s759] sm:$0xff]
        %v948 = vld [vmem:[%s759 + $0x8] sm:$0xff]
        %v949 = vld [vmem:[%s759 + $0x10] sm:$0xff]
        %v950 = vld [vmem:[%s759 + $0x18] sm:$0xff]
        %v951 = vpack.c.bf16 %v940, %v939
        %v952 = vpack.c.bf16 %v942, %v941
        %v953 = vpack.c.bf16 %v944, %v943
        %v954 = vpack.c.bf16 %v946, %v945
        %v955 = vpack.c.bf16 %v948, %v947
        %v956 = vpack.c.bf16 %v950, %v949
        %v957 = vld [vmem:[%s914] sm:$0xf]
        %v958 = vld [vmem:[%s914 + $0x4] sm:$0xf]
        %v959 = vld [vmem:[%s914 + $0x8] sm:$0xf]
        %v960 = vld [vmem:[%s914 + $0xc] sm:$0xf]
        %v961 = vld [vmem:[%s914 + $0x10] sm:$0xf]
        %v962 = vld [vmem:[%s914 + $0x14] sm:$0xf]
        %v963 = vld [vmem:[%s914 + $0x18] sm:$0xf]
        %v964 = vld [vmem:[%s914 + $0x1c] sm:$0xf]
        %v965 = vld [vmem:[%s914 + $0x20] sm:$0xf]
        %v966 = vld [vmem:[%s914 + $0x24] sm:$0xf]
        %v967 = vld [vmem:[%s914 + $0x28] sm:$0xf]
        %v968 = vld [vmem:[%s914 + $0x2c] sm:$0xf]
        %v973 = vunpack.c.l.b16 %v957
        %v974 = vunpack.c.l.b16 %v958
        %v975 = vunpack.c.l.b16 %v959
        %v976 = vunpack.c.l.b16 %v960
        %v977 = vpack.c.b16 %v974, %v973
        %v978 = vpack.c.b16 %v976, %v975
        %vm981 = vcmask 261120
        %v983 = vsel %vm981, %v951, 0
        %985 = vmatpush.bf16.msra.mxu0 0
        %986 = vmatpush.bf16.msra.mxu0 0
        %987 = vmatpush.bf16.msra.mxu0 0
        %988 = vmatpush.bf16.msra.mxu0 0
        %989 = vmatpush.bf16.msra.mxu0 0
        %990 = vmatpush.bf16.msra.mxu0 0
        %991 = vmatpush.bf16.msra.mxu0 %v978
        %992 = vmatpush.bf16.msra.mxu0 %v977
        %993 = vmatmul.bf16.gmra.mxu0 %v983
        %v994 = vpop.f32.mrf.mxu0
        %v995 = vadd.f32 0.0, %v994
        %v996 = vpop.f32.mrf.mxu0
        %v997 = vadd.f32 0.0, %v996
        %998 = vdwg.mxu0
        %v1003 = vunpack.c.l.b16 %v961
        %v1004 = vunpack.c.l.b16 %v962
        %v1005 = vunpack.c.l.b16 %v963
        %v1006 = vunpack.c.l.b16 %v964
        %v1007 = vpack.c.b16 %v1004, %v1003
        %v1008 = vpack.c.b16 %v1006, %v1005
        %1011 = vmatpush.bf16.msra.mxu0 0
        %1012 = vmatpush.bf16.msra.mxu0 0
        %1013 = vmatpush.bf16.msra.mxu0 0
        %1014 = vmatpush.bf16.msra.mxu0 0
        %1015 = vmatpush.bf16.msra.mxu0 0
        %1016 = vmatpush.bf16.msra.mxu0 0
        %1017 = vmatpush.bf16.msra.mxu0 %v1008
        %1018 = vmatpush.bf16.msra.mxu0 %v1007
        %1019 = vmatmul.bf16.gmra.mxu0 %v983
        %v1020 = vpop.f32.mrf.mxu0
        %v1021 = vadd.f32 0.0, %v1020
        %v1022 = vpop.f32.mrf.mxu0
        %v1023 = vadd.f32 0.0, %v1022
        %1024 = vdwg.mxu0
        %v1025 = vld [vmem:[%s4] sm:$0xff]
        %v1026 = vld [vmem:[%s4 + $0x8] sm:$0xff]
        %v1027 = vld [vmem:[%s4 + $0x10] sm:$0xff]
        %v1028 = vld [vmem:[%s4 + $0x18] sm:$0xff]
        %v1029 = vld [vmem:[%s5] sm:$0xff]
        %v1030 = vld [vmem:[%s5 + $0x8] sm:$0xff]
        %v1031 = vld [vmem:[%s5 + $0x10] sm:$0xff]
        %v1032 = vld [vmem:[%s5 + $0x18] sm:$0xff]
        %vm1033 = vcmask 130048
        %v1035 = vsel %vm1033, %v1029, 0
        %v1038 = vsel %vm1033, %v1030, 0
        %v1041 = vsel %vm1033, %v1031, 0
        %v1044 = vsel %vm1033, %v1032, 0
        %1046 = vmatpush.msra.mxu0 0.0
        %1047 = vmatpush.msra.mxu0 0.0
        %1048 = vmatpush.msra.mxu0 0.0
        %1049 = vmatpush.msra.mxu0 0.0
        %1050 = vmatpush.msra.mxu0 0.0
        %1051 = vmatpush.msra.mxu0 0.0
        %1052 = vmatpush.msra.mxu0 0.0
        %1053 = vmatpush.msra.mxu0 0.0
        %1054 = vmatpush.msra.mxu0 0.0
        %1055 = vmatpush.msra.mxu0 0.0
        %1056 = vmatpush.msra.mxu0 0.0
        %1057 = vmatpush.msra.mxu0 0.0
        %1058 = vmatpush.msra.mxu0 0.0
        %1059 = vmatpush.msra.mxu0 0.0
        %1060 = vmatpush.msra.mxu0 %v1023
        %1061 = vmatpush.msra.mxu0 %v1021
        %1062 = vmatmul.f32.gmra.mxu0 %v1035
        %v1063 = vpop.f32.mrf.mxu0
        %v1064 = vadd.f32 0.0, %v1063
        %1065 = vmatmul.f32.gmra.mxu0 %v1038
        %v1066 = vpop.f32.mrf.mxu0
        %v1067 = vadd.f32 0.0, %v1066
        %1068 = vmatmul.f32.gmra.mxu0 %v1041
        %v1069 = vpop.f32.mrf.mxu0
        %v1070 = vadd.f32 0.0, %v1069
        %1071 = vmatmul.f32.gmra.mxu0 %v1044
        %v1072 = vpop.f32.mrf.mxu0
        %v1073 = vadd.f32 0.0, %v1072
        %1074 = vdwg.mxu0
        %v1076 = vsel %vm1033, %v1025, 0
        %v1079 = vsel %vm1033, %v1026, 0
        %v1082 = vsel %vm1033, %v1027, 0
        %v1085 = vsel %vm1033, %v1028, 0
        %1087 = vmatpush.msra.mxu0 0.0
        %1088 = vmatpush.msra.mxu0 0.0
        %1089 = vmatpush.msra.mxu0 0.0
        %1090 = vmatpush.msra.mxu0 0.0
        %1091 = vmatpush.msra.mxu0 0.0
        %1092 = vmatpush.msra.mxu0 0.0
        %1093 = vmatpush.msra.mxu0 0.0
        %1094 = vmatpush.msra.mxu0 0.0
        %1095 = vmatpush.msra.mxu0 0.0
        %1096 = vmatpush.msra.mxu0 0.0
        %1097 = vmatpush.msra.mxu0 0.0
        %1098 = vmatpush.msra.mxu0 0.0
        %1099 = vmatpush.msra.mxu0 0.0
        %1100 = vmatpush.msra.mxu0 0.0
        %1101 = vmatpush.msra.mxu0 %v997
        %1102 = vmatpush.msra.mxu0 %v995
        %1103 = vmatmul.f32.gmra.mxu0 %v1076
        %v1104 = vpop.f32.mrf.mxu0
        %v1105 = vadd.f32 %v1064, %v1104
        %1106 = vmatmul.f32.gmra.mxu0 %v1079
        %v1107 = vpop.f32.mrf.mxu0
        %v1108 = vadd.f32 %v1067, %v1107
        %1109 = vmatmul.f32.gmra.mxu0 %v1082
        %v1110 = vpop.f32.mrf.mxu0
        %v1111 = vadd.f32 %v1070, %v1110
        %1112 = vmatmul.f32.gmra.mxu0 %v1085
        %v1113 = vpop.f32.mrf.mxu0
        %v1114 = vadd.f32 %v1073, %v1113
        %1115 = vdwg.mxu0
        %v1120 = vunpack.c.l.b16 %v965
        %v1121 = vunpack.c.l.b16 %v966
        %v1122 = vunpack.c.l.b16 %v967
        %v1123 = vunpack.c.l.b16 %v968
        %v1124 = vpack.c.b16 %v1121, %v1120
        %v1125 = vpack.c.b16 %v1123, %v1122
        %v1129 = vsel %vm981, %v952, 0
        %v1132 = vsel %vm981, %v953, 0
        %1134 = vmatpush.bf16.msra.mxu0 0
        %1135 = vmatpush.bf16.msra.mxu0 0
        %1136 = vmatpush.bf16.msra.mxu0 0
        %1137 = vmatpush.bf16.msra.mxu0 0
        %1138 = vmatpush.bf16.msra.mxu0 0
        %1139 = vmatpush.bf16.msra.mxu0 0
        %1140 = vmatpush.bf16.msra.mxu0 %v1125
        %1141 = vmatpush.bf16.msra.mxu0 %v1124
        %1142 = vmatmul.bf16.gmra.mxu0 %v1129
        %v1143 = vpop.f32.mrf.mxu0
        %v1144 = vadd.f32 0.0, %v1143
        %v1145 = vpop.f32.mrf.mxu0
        %v1146 = vadd.f32 0.0, %v1145
        %1147 = vmatmul.bf16.gmra.mxu0 %v1132
        %v1148 = vpop.f32.mrf.mxu0
        %v1149 = vadd.f32 0.0, %v1148
        %v1150 = vpop.f32.mrf.mxu0
        %v1151 = vadd.f32 0.0, %v1150
        %1152 = vdwg.mxu0
        %v1153 = vadd.f32 %v1105, %v1144
        %v1154 = vadd.f32 %v1108, %v1146
        %v1155 = vadd.f32 %v1111, %v1149
        %v1156 = vadd.f32 %v1114, %v1151
        %v1157 = vld [vmem:[%s917] sm:$0x1]
        %v1159 = vperm.slane %v1157, 0
        %v1161 = vadd.f32 %v1153, %v1159
        %v1162 = vadd.f32 %v1154, %v1159
        %v1163 = vadd.f32 %v1155, %v1159
        %v1164 = vadd.f32 %v1156, %v1159
        %v1165 = vld [vmem:[%s774] sm:$0xf]
        %v1166 = vld [vmem:[%s774 + $0x4] sm:$0xf]
        %v1167 = vld [vmem:[%s774 + $0x8] sm:$0xf]
        %v1168 = vld [vmem:[%s774 + $0xc] sm:$0xf]
        %v1169 = vld [vmem:[%s920] sm:$0x1]
        %v1171 = vperm.slane %v1169, 0
        %v1177 = vunpack.c.l.b16 %v1165
        %v1178 = vunpack.c.l.b16 %v1166
        %v1179 = vunpack.c.l.b16 %v1167
        %v1180 = vunpack.c.l.b16 %v1168
        %v1181 = vpack.c.b16 %v1178, %v1177
        %v1182 = vpack.c.b16 %v1180, %v1179
        %v1186 = vsel %vm981, %v955, 0
        %v1189 = vsel %vm981, %v956, 0
        %1191 = vmatpush.bf16.msra.mxu0 0
        %1192 = vmatpush.bf16.msra.mxu0 0
        %1193 = vmatpush.bf16.msra.mxu0 0
        %1194 = vmatpush.bf16.msra.mxu0 0
        %1195 = vmatpush.bf16.msra.mxu0 0
        %1196 = vmatpush.bf16.msra.mxu0 0
        %1197 = vmatpush.bf16.msra.mxu0 %v1182
        %1198 = vmatpush.bf16.msra.mxu0 %v1181
        %1199 = vmatmul.bf16.gmra.mxu0 %v1186
        %v1200 = vpop.f32.mrf.mxu0
        %v1201 = vadd.f32 %v1171, %v1200
        %v1202 = vpop.f32.mrf.mxu0
        %v1203 = vadd.f32 %v1171, %v1202
        %1204 = vmatmul.bf16.gmra.mxu0 %v1189
        %v1205 = vpop.f32.mrf.mxu0
        %v1206 = vadd.f32 %v1171, %v1205
        %v1207 = vpop.f32.mrf.mxu0
        %v1208 = vadd.f32 %v1171, %v1207
        %1209 = vdwg.mxu0
        %v1210 = vadd.f32 %v1161, %v1201
        %v1211 = vadd.f32 %v1162, %v1203
        %v1212 = vadd.f32 %v1163, %v1206
        %v1213 = vadd.f32 %v1164, %v1208
        %v1214 = vxor.u32 %v1210, 2147483648
        %v1215 = vxor.u32 %v1211, 2147483648
        %v1216 = vxor.u32 %v1212, 2147483648
        %v1217 = vxor.u32 %v1213, 2147483648
        %v1218 = vmul.f32 %v1214, 1.442695
        %v1219 = vpow.pop %v1218
        %v1220 = vmul.f32 %v1215, 1.442695
        %v1221 = vpow.pop %v1220
        %v1222 = vmul.f32 %v1216, 1.442695
        %v1223 = vpow.pop %v1222
        %v1224 = vmul.f32 %v1217, 1.442695
        %v1225 = vpow.pop %v1224
        %v1226 = vadd.f32 %v1219, 1.0
        %v1227 = vadd.f32 %v1221, 1.0
        %v1228 = vadd.f32 %v1223, 1.0
        %v1229 = vadd.f32 %v1225, 1.0
        %v1230 = vrcp.pop %v1226
        %v1231 = vmul.f32 %v1226, %v1230
        %v1232 = vsub.f32 1.0, %v1231
        %v1233 = vmul.f32 %v1230, %v1232
        %v1234 = vadd.f32 %v1230, %v1233
        %vm1235 = vweird.f32 %v1226
        %vm1236 = vweird.f32 %v1230
        %vm1237 = vmor %vm1235, %vm1236
        %v1238 = vsel %vm1237, %v1230, %v1234
        %v1239 = vand.u32 2147483647, %v1226
        %vm1240 = vcmp.eq.f32.partialorder %v1239, 8.507059e+37
        %v1241 = vand.u32 %v1226, 2147483648
        %v1242 = vor.u32 1.1754944e-38, %v1241
        %v1243 = vsel %vm1240, %v1242, %v1238
        %v1244 = vmul.f32 1.0, %v1243
        %v1245 = vrcp.pop %v1227
        %v1246 = vmul.f32 %v1227, %v1245
        %v1247 = vsub.f32 1.0, %v1246
        %v1248 = vmul.f32 %v1245, %v1247
        %v1249 = vadd.f32 %v1245, %v1248
        %vm1250 = vweird.f32 %v1227
        %vm1251 = vweird.f32 %v1245
        %vm1252 = vmor %vm1250, %vm1251
        %v1253 = vsel %vm1252, %v1245, %v1249
        %v1254 = vand.u32 2147483647, %v1227
        %vm1255 = vcmp.eq.f32.partialorder %v1254, 8.507059e+37
        %v1256 = vand.u32 %v1227, 2147483648
        %v1257 = vor.u32 1.1754944e-38, %v1256
        %v1258 = vsel %vm1255, %v1257, %v1253
        %v1259 = vmul.f32 1.0, %v1258
        %v1260 = vrcp.pop %v1228
        %v1261 = vmul.f32 %v1228, %v1260
        %v1262 = vsub.f32 1.0, %v1261
        %v1263 = vmul.f32 %v1260, %v1262
        %v1264 = vadd.f32 %v1260, %v1263
        %vm1265 = vweird.f32 %v1228
        %vm1266 = vweird.f32 %v1260
        %vm1267 = vmor %vm1265, %vm1266
        %v1268 = vsel %vm1267, %v1260, %v1264
        %v1269 = vand.u32 2147483647, %v1228
        %vm1270 = vcmp.eq.f32.partialorder %v1269, 8.507059e+37
        %v1271 = vand.u32 %v1228, 2147483648
        %v1272 = vor.u32 1.1754944e-38, %v1271
        %v1273 = vsel %vm1270, %v1272, %v1268
        %v1274 = vmul.f32 1.0, %v1273
        %v1275 = vrcp.pop %v1229
        %v1276 = vmul.f32 %v1229, %v1275
        %v1277 = vsub.f32 1.0, %v1276
        %v1278 = vmul.f32 %v1275, %v1277
        %v1279 = vadd.f32 %v1275, %v1278
        %vm1280 = vweird.f32 %v1229
        %vm1281 = vweird.f32 %v1275
        %vm1282 = vmor %vm1280, %vm1281
        %v1283 = vsel %vm1282, %v1275, %v1279
        %v1284 = vand.u32 2147483647, %v1229
        %vm1285 = vcmp.eq.f32.partialorder %v1284, 8.507059e+37
        %v1286 = vand.u32 %v1229, 2147483648
        %v1287 = vor.u32 1.1754944e-38, %v1286
        %v1288 = vsel %vm1285, %v1287, %v1283
        %v1289 = vmul.f32 1.0, %v1288
        %1294 = vrot.lane.b32.xlu0 %v1201, 64
        %v1295 = vpop.permute.xlu0 %1294
        %1296 = vrot.lane.b32.xlu0 %v1203, 64
        %v1297 = vpop.permute.xlu0 %1296
        %1298 = vrot.lane.b32.xlu0 %v1206, 64
        %v1299 = vpop.permute.xlu0 %1298
        %1300 = vrot.lane.b32.xlu0 %v1208, 64
        %v1301 = vpop.permute.xlu0 %1300
        %v1306 = vmul.f32 %v1244, %v1295
        %v1307 = vmul.f32 %v1259, %v1297
        %v1308 = vmul.f32 %v1274, %v1299
        %v1309 = vmul.f32 %v1289, %v1301
        %1314 = vrot.lane.b32.xlu0 %v1306, 64
        %v1315 = vpop.permute.xlu0 %1314
        %1316 = vrot.lane.b32.xlu0 %v1307, 64
        %v1317 = vpop.permute.xlu0 %1316
        %1318 = vrot.lane.b32.xlu0 %v1308, 64
        %v1319 = vpop.permute.xlu0 %1318
        %1320 = vrot.lane.b32.xlu0 %v1309, 64
        %v1321 = vpop.permute.xlu0 %1320
        %v1326 = vadd.f32 %v1161, %v1315
        %v1327 = vadd.f32 %v1162, %v1317
        %v1328 = vadd.f32 %v1163, %v1319
        %v1329 = vadd.f32 %v1164, %v1321
        %v1330 = vtanh.pop %v1326
        %v1331 = vtanh.pop %v1327
        %v1332 = vtanh.pop %v1328
        %v1333 = vtanh.pop %v1329
        %v1334 = vsub.f32 1.0, %v1244
        %v1335 = vsub.f32 1.0, %v1259
        %v1336 = vsub.f32 1.0, %v1274
        %v1337 = vsub.f32 1.0, %v1289
        %1342 = vrot.lane.b32.xlu0 %v1330, 96
        %v1343 = vpop.permute.xlu0 %1342
        %1344 = vrot.lane.b32.xlu0 %v1331, 96
        %v1345 = vpop.permute.xlu0 %1344
        %1346 = vrot.lane.b32.xlu0 %v1332, 96
        %v1347 = vpop.permute.xlu0 %1346
        %1348 = vrot.lane.b32.xlu0 %v1333, 96
        %v1349 = vpop.permute.xlu0 %1348
        %v1354 = vmul.f32 %v1334, %v1343
        %v1355 = vmul.f32 %v1335, %v1345
        %v1356 = vmul.f32 %v1336, %v1347
        %v1357 = vmul.f32 %v1337, %v1349
        %1362 = vrot.lane.b32.xlu0 %v947, 32
        %v1363 = vpop.permute.xlu0 %1362
        %1364 = vrot.lane.b32.xlu0 %v948, 32
        %v1365 = vpop.permute.xlu0 %1364
        %1366 = vrot.lane.b32.xlu0 %v949, 32
        %v1367 = vpop.permute.xlu0 %1366
        %1368 = vrot.lane.b32.xlu0 %v950, 32
        %v1369 = vpop.permute.xlu0 %1368
        %v1374 = vmul.f32 %v1244, %v1363
        %v1375 = vmul.f32 %v1259, %v1365
        %v1376 = vmul.f32 %v1274, %v1367
        %v1377 = vmul.f32 %v1289, %v1369
        %v1378 = vadd.f32 %v1354, %v1374
        %v1379 = vadd.f32 %v1355, %v1375
        %v1380 = vadd.f32 %v1356, %v1376
        %v1381 = vadd.f32 %v1357, %v1377
        %v1382 = vld [vmem:[#allocation9] sm:$0xff]
        %v1383 = vld [vmem:[#allocation9 + $0x8] sm:$0xff]
        %1388 = vrot.lane.b32.xlu0 %v1378, 96
        %v1389 = vpop.permute.xlu0 %1388
        %1390 = vrot.lane.b32.xlu0 %v1379, 96
        %v1391 = vpop.permute.xlu0 %1390
        %1392 = vrot.lane.b32.xlu0 %v1380, 96
        %v1393 = vpop.permute.xlu0 %1392
        %1394 = vrot.lane.b32.xlu0 %v1381, 96
        %v1395 = vpop.permute.xlu0 %1394
        %v1401 = vsel %vm981, %v1382, 0
        %v1404 = vsel %vm981, %v1383, 0
        %1406 = vmatpush.msra.mxu0 0.0
        %1407 = vmatpush.msra.mxu0 0.0
        %1408 = vmatpush.msra.mxu0 0.0
        %1409 = vmatpush.msra.mxu0 0.0
        %1410 = vmatpush.msra.mxu0 0.0
        %1411 = vmatpush.msra.mxu0 0.0
        %1412 = vmatpush.msra.mxu0 0.0
        %1413 = vmatpush.msra.mxu0 0.0
        %1414 = vmatpush.msra.mxu0 0.0
        %1415 = vmatpush.msra.mxu0 0.0
        %1416 = vmatpush.msra.mxu0 0.0
        %1417 = vmatpush.msra.mxu0 0.0
        %1418 = vmatpush.msra.mxu0 %v1395
        %1419 = vmatpush.msra.mxu0 %v1393
        %1420 = vmatpush.msra.mxu0 %v1391
        %1421 = vmatpush.msra.mxu0 %v1389
        %1422 = vmatmul.f32.gmra.mxu0 %v1401
        %v1423 = vpop.f32.mrf.mxu0
        %v1424 = vadd.f32 0.0, %v1423
        %1425 = vmatmul.f32.gmra.mxu0 %v1404
        %v1426 = vpop.f32.mrf.mxu0
        %v1427 = vadd.f32 0.0, %v1426
        %1428 = vdwg.mxu0
        %v1429 = vld [vmem:[%s784] sm:$0xf]
        %v1430 = vld [vmem:[%s784 + $0x4] sm:$0xf]
        %v1431 = vld [vmem:[%s784 + $0x8] sm:$0xf]
        %v1432 = vld [vmem:[%s784 + $0xc] sm:$0xf]
        %v1433 = vld [vmem:[%s784 + $0x10] sm:$0xf]
        %v1434 = vld [vmem:[%s784 + $0x14] sm:$0xf]
        %v1435 = vld [vmem:[%s784 + $0x18] sm:$0xf]
        %v1436 = vld [vmem:[%s784 + $0x1c] sm:$0xf]
        %v1437 = vpack.c.bf16 %v1427, %v1424
        %v1442 = vunpack.c.l.b16 %v1433
        %v1443 = vunpack.c.l.b16 %v1434
        %v1444 = vunpack.c.l.b16 %v1435
        %v1445 = vunpack.c.l.b16 %v1436
        %v1446 = vpack.c.b16 %v1443, %v1442
        %v1447 = vpack.c.b16 %v1445, %v1444
        %v1451 = vsel %vm981, %v1437, 0
        %1453 = vmatpush.bf16.msra.mxu0 0
        %1454 = vmatpush.bf16.msra.mxu0 0
        %1455 = vmatpush.bf16.msra.mxu0 0
        %1456 = vmatpush.bf16.msra.mxu0 0
        %1457 = vmatpush.bf16.msra.mxu0 0
        %1458 = vmatpush.bf16.msra.mxu0 0
        %1459 = vmatpush.bf16.msra.mxu0 %v1447
        %1460 = vmatpush.bf16.msra.mxu0 %v1446
        %1461 = vmatmul.bf16.gmra.mxu0 %v1451
        %v1462 = vpop.f32.mrf.mxu0
        %v1463 = vadd.f32 0.0, %v1462
        %v1464 = vpop.f32.mrf.mxu0
        %v1465 = vadd.f32 0.0, %v1464
        %1466 = vdwg.mxu0
        %v1471 = vunpack.c.l.b16 %v1429
        %v1472 = vunpack.c.l.b16 %v1430
        %v1473 = vunpack.c.l.b16 %v1431
        %v1474 = vunpack.c.l.b16 %v1432
        %v1475 = vpack.c.b16 %v1472, %v1471
        %v1476 = vpack.c.b16 %v1474, %v1473
        %1479 = vmatpush.bf16.msra.mxu0 0
        %1480 = vmatpush.bf16.msra.mxu0 0
        %1481 = vmatpush.bf16.msra.mxu0 0
        %1482 = vmatpush.bf16.msra.mxu0 0
        %1483 = vmatpush.bf16.msra.mxu0 0
        %1484 = vmatpush.bf16.msra.mxu0 0
        %1485 = vmatpush.bf16.msra.mxu0 %v1476
        %1486 = vmatpush.bf16.msra.mxu0 %v1475
        %1487 = vmatmul.bf16.gmra.mxu0 %v983
        %v1488 = vpop.f32.mrf.mxu0
        %v1489 = vadd.f32 %v1463, %v1488
        %v1490 = vpop.f32.mrf.mxu0
        %v1491 = vadd.f32 %v1465, %v1490
        %1492 = vdwg.mxu0
        %v1493 = vld [vmem:[%s803] sm:$0x1]
        %v1495 = vperm.slane %v1493, 0
        %v1497 = vadd.f32 %v1489, %v1495
        %v1498 = vadd.f32 %v1491, %v1495
        %v1499 = vld [vmem:[%s794] sm:$0xf]
        %v1500 = vld [vmem:[%s794 + $0x4] sm:$0xf]
        %v1501 = vld [vmem:[%s794 + $0x8] sm:$0xf]
        %v1502 = vld [vmem:[%s794 + $0xc] sm:$0xf]
        %v1503 = vld [vmem:[%s812] sm:$0x1]
        %v1505 = vperm.slane %v1503, 0
        %v1511 = vunpack.c.l.b16 %v1499
        %v1512 = vunpack.c.l.b16 %v1500
        %v1513 = vunpack.c.l.b16 %v1501
        %v1514 = vunpack.c.l.b16 %v1502
        %v1515 = vpack.c.b16 %v1512, %v1511
        %v1516 = vpack.c.b16 %v1514, %v1513
        %v1520 = vsel %vm981, %v954, 0
        %1522 = vmatpush.bf16.msra.mxu0 0
        %1523 = vmatpush.bf16.msra.mxu0 0
        %1524 = vmatpush.bf16.msra.mxu0 0
        %1525 = vmatpush.bf16.msra.mxu0 0
        %1526 = vmatpush.bf16.msra.mxu0 0
        %1527 = vmatpush.bf16.msra.mxu0 0
        %1528 = vmatpush.bf16.msra.mxu0 %v1516
        %1529 = vmatpush.bf16.msra.mxu0 %v1515
        %1530 = vmatmul.bf16.gmra.mxu0 %v1520
        %v1531 = vpop.f32.mrf.mxu0
        %v1532 = vadd.f32 %v1505, %v1531
        %v1533 = vpop.f32.mrf.mxu0
        %v1534 = vadd.f32 %v1505, %v1533
        %1535 = vdwg.mxu0
        %v1536 = vadd.f32 %v1497, %v1532
        %v1537 = vadd.f32 %v1498, %v1534
        %v1538 = vxor.u32 %v1536, 2147483648
        %v1539 = vxor.u32 %v1537, 2147483648
        %v1540 = vmul.f32 %v1538, 1.442695
        %v1541 = vpow.pop %v1540
        %v1542 = vmul.f32 %v1539, 1.442695
        %v1543 = vpow.pop %v1542
        %v1544 = vadd.f32 %v1541, 1.0
        %v1545 = vadd.f32 %v1543, 1.0
        %v1546 = vrcp.pop %v1544
        %v1547 = vmul.f32 %v1544, %v1546
        %v1548 = vsub.f32 1.0, %v1547
        %v1549 = vmul.f32 %v1546, %v1548
        %v1550 = vadd.f32 %v1546, %v1549
        %vm1551 = vweird.f32 %v1544
        %vm1552 = vweird.f32 %v1546
        %vm1553 = vmor %vm1551, %vm1552
        %v1554 = vsel %vm1553, %v1546, %v1550
        %v1555 = vand.u32 2147483647, %v1544
        %vm1556 = vcmp.eq.f32.partialorder %v1555, 8.507059e+37
        %v1557 = vand.u32 %v1544, 2147483648
        %v1558 = vor.u32 1.1754944e-38, %v1557
        %v1559 = vsel %vm1556, %v1558, %v1554
        %v1560 = vmul.f32 1.0, %v1559
        %v1561 = vrcp.pop %v1545
        %v1562 = vmul.f32 %v1545, %v1561
        %v1563 = vsub.f32 1.0, %v1562
        %v1564 = vmul.f32 %v1561, %v1563
        %v1565 = vadd.f32 %v1561, %v1564
        %vm1566 = vweird.f32 %v1545
        %vm1567 = vweird.f32 %v1561
        %vm1568 = vmor %vm1566, %vm1567
        %v1569 = vsel %vm1568, %v1561, %v1565
        %v1570 = vand.u32 2147483647, %v1545
        %vm1571 = vcmp.eq.f32.partialorder %v1570, 8.507059e+37
        %v1572 = vand.u32 %v1545, 2147483648
        %v1573 = vor.u32 1.1754944e-38, %v1572
        %v1574 = vsel %vm1571, %v1573, %v1569
        %v1575 = vmul.f32 1.0, %v1574
        %1578 = vrot.lane.b32.xlu0 %v1532, 64
        %v1579 = vpop.permute.xlu0 %1578
        %1580 = vrot.lane.b32.xlu0 %v1534, 64
        %v1581 = vpop.permute.xlu0 %1580
        %v1584 = vmul.f32 %v1560, %v1579
        %v1585 = vmul.f32 %v1575, %v1581
        %1588 = vrot.lane.b32.xlu0 %v1584, 64
        %v1589 = vpop.permute.xlu0 %1588
        %1590 = vrot.lane.b32.xlu0 %v1585, 64
        %v1591 = vpop.permute.xlu0 %1590
        %v1594 = vadd.f32 %v1497, %v1589
        %v1595 = vadd.f32 %v1498, %v1591
        %v1596 = vtanh.pop %v1594
        %v1597 = vtanh.pop %v1595
        %v1598 = vsub.f32 1.0, %v1560
        %v1599 = vsub.f32 1.0, %v1575
        %1602 = vrot.lane.b32.xlu0 %v1596, 96
        %v1603 = vpop.permute.xlu0 %1602
        %1604 = vrot.lane.b32.xlu0 %v1597, 96
        %v1605 = vpop.permute.xlu0 %1604
        %v1608 = vmul.f32 %v1598, %v1603
        %v1609 = vmul.f32 %v1599, %v1605
        %1612 = vrot.lane.b32.xlu0 %v945, 32
        %v1613 = vpop.permute.xlu0 %1612
        %1614 = vrot.lane.b32.xlu0 %v946, 32
        %v1615 = vpop.permute.xlu0 %1614
        %v1618 = vmul.f32 %v1560, %v1613
        %v1619 = vmul.f32 %v1575, %v1615
        %v1620 = vadd.f32 %v1608, %v1618
        %v1621 = vadd.f32 %v1609, %v1619
        %1624 = vrot.lane.b32.xlu0 %v1620, 96
        %v1625 = vpop.permute.xlu0 %1624
        %1626 = vrot.lane.b32.xlu0 %v1621, 96
        %v1627 = vpop.permute.xlu0 %1626
        %1630 = vst.msk [vmem:[%s902] sm:$0xff] %vm981, %v1625
        %1631 = vst.msk [vmem:[%s902 + $0x8] sm:$0xff] %vm981, %v1627
        %1632 = vst.msk [vmem:[%s909] sm:$0xff] %vm981, %v1389
        %1633 = vst.msk [vmem:[%s909 + $0x8] sm:$0xff] %vm981, %v1391
        %1634 = vst.msk [vmem:[%s909 + $0x10] sm:$0xff] %vm981, %v1393
        %1635 = vst.msk [vmem:[%s909 + $0x18] sm:$0xff] %vm981, %v1395
        %1636 = vst.msk [vmem:[#allocation18] sm:$0xff] %vm981, %v1625
        %1637 = vst.msk [vmem:[#allocation18 + $0x8] sm:$0xff] %vm981, %v1627
        %1638 = vst.msk [vmem:[#allocation19] sm:$0xff] %vm981, %v1389
        %1639 = vst.msk [vmem:[#allocation19 + $0x8] sm:$0xff] %vm981, %v1391
        %1640 = vst.msk [vmem:[#allocation19 + $0x10] sm:$0xff] %vm981, %v1393
        %1641 = vst.msk [vmem:[#allocation19 + $0x18] sm:$0xff] %vm981, %v1395
        %s1642 = sand.u32 %s43, 1
        %s1643 = scalar_lea.sflag [#allocation4], %s1642
        %s1644 = sand.u32 %s458, 1
        %s1645 = smul.addr %s1644, 16
        %s1646 = scalar_lea.vmem [#allocation21], %s1645
        %s1647 = sand.u32 %s43, 1
        %s1648 = scalar_lea.sflag [#allocation4], %s1647
        %s1649 = sand.u32 %s484, 1
        %s1650 = smul.addr %s1649, 32
        %s1651 = scalar_lea.vmem [#allocation22], %s1650
        // Predicated region
        $region125: #{multi_layer_recurrent_gn.1} parent=79 // pred_check
          %p1652 = pneg %p421
        $region126: #{multi_layer_recurrent_gn.1} parent=79 // pred_check_branch
          %1654 = sbr.rel (%p1652) target = $region128
        $region127: #{multi_layer_recurrent_gn.1} parent=79 // pred_region
          %1656 = vsyncadd [#allocation4], 0
          %s1657 = sshll.u32 [#allocation18], 4
          %s1658 = int_to_ptr.vmem [resolvable:$true] %s1657
          %s1659 = sshll.u32 %s15, 4
          %s1660 = int_to_ptr.hbm [resolvable:$true] %s1659
          %1665 = dma.vmem_to_hbm [thread:$0]  %s1658, 256, %s1660, [#allocation4], 128, 128, 8
        $region128: #{multi_layer_recurrent_gn.1} parent=79 // pred_fallthru
          _
        // Predicated region
        $region129: #{multi_layer_recurrent_gn.1} parent=79 // pred_check
          %p1666 = pneg %p442
        $region130: #{multi_layer_recurrent_gn.1} parent=79 // pred_check_branch
          %1668 = sbr.rel (%p1666) target = $region132
        $region131: #{multi_layer_recurrent_gn.1} parent=79 // pred_region
          %1670 = vsyncadd [#allocation20], 0
          %s1671 = sshll.u32 [#allocation19], 4
          %s1672 = int_to_ptr.vmem [resolvable:$true] %s1671
          %s1673 = sshll.u32 %s16, 4
          %s1674 = int_to_ptr.hbm [resolvable:$true] %s1673
          %1679 = dma.vmem_to_hbm [thread:$0]  %s1672, 512, %s1674, [#allocation20], 128, 128, 8
        $region132: #{multi_layer_recurrent_gn.1} parent=79 // pred_fallthru
          _
        // Predicated region
        $region133: #{multi_layer_recurrent_gn.1} parent=79 // pred_check
          %p1680 = pneg %p468
        $region134: #{multi_layer_recurrent_gn.1} parent=79 // pred_check_branch
          %1682 = sbr.rel (%p1680) target = $region136
        $region135: #{multi_layer_recurrent_gn.1} parent=79 // pred_region
          %1684 = vsyncadd %s1643, 0
          %s1685 = smul.addr %s43, 2
          %s1686 = smul.addr %s1685, 8
          %s1687 = scalar_lea.hbm %s17, %s1686
          %s1688 = sshll.u32 %s1646, 4
          %s1689 = int_to_ptr.vmem [resolvable:$true] %s1688
          %s1690 = sshll.u32 %s1687, 4
          %s1691 = int_to_ptr.hbm [resolvable:$true] %s1690
          %1696 = dma.vmem_to_hbm [thread:$0]  %s1689, 256, %s1691, %s1643, 128, 128, 8
        $region136: #{multi_layer_recurrent_gn.1} parent=79 // pred_fallthru
          _
        // Predicated region
        $region137: #{multi_layer_recurrent_gn.1} parent=79 // pred_check
          %p1697 = pneg %p494
        $region138: #{multi_layer_recurrent_gn.1} parent=79 // pred_check_branch
          %1699 = sbr.rel (%p1697) target = $region140
        $region139: #{multi_layer_recurrent_gn.1} parent=79 // pred_region
          %1701 = vsyncadd %s1648, 0
          %s1702 = smul.addr %s43, 4
          %s1703 = smul.addr %s1702, 8
          %s1704 = scalar_lea.hbm %s18, %s1703
          %s1705 = sshll.u32 %s1651, 4
          %s1706 = int_to_ptr.vmem [resolvable:$true] %s1705
          %s1707 = sshll.u32 %s1704, 4
          %s1708 = int_to_ptr.hbm [resolvable:$true] %s1707
          %1713 = dma.vmem_to_hbm [thread:$0]  %s1706, 512, %s1708, %s1648, 128, 128, 8
        $region140: #{multi_layer_recurrent_gn.1} parent=79 // pred_fallthru
          _
        // Predicated region
        $region141: #{multi_layer_recurrent_gn.1} parent=79 // pred_check
          %p1714 = pneg %p421
        $region142: #{multi_layer_recurrent_gn.1} parent=79 // pred_check_branch
          %1716 = sbr.rel (%p1714) target = $region144
        $region143: #{multi_layer_recurrent_gn.1} parent=79 // pred_region
          %1718 = dma.done [#allocation4], 256
        $region144: #{multi_layer_recurrent_gn.1} parent=79 // pred_fallthru
          _
        // Predicated region
        $region145: #{multi_layer_recurrent_gn.1} parent=79 // pred_check
          %p1719 = pneg %p442
        $region146: #{multi_layer_recurrent_gn.1} parent=79 // pred_check_branch
          %1721 = sbr.rel (%p1719) target = $region148
        $region147: #{multi_layer_recurrent_gn.1} parent=79 // pred_region
          %1723 = dma.done [#allocation20], 512
        $region148: #{multi_layer_recurrent_gn.1} parent=79 // pred_fallthru
          _
      $region80: #{multi_layer_recurrent_gn.1} parent=5 // pred_fallthru
        _
      %p1724 = scmp.le.s32.totalorder 2, %s38
      // Predicated region
      $region149: #{multi_layer_recurrent_gn.1} parent=5 // pred_check
        %p1725 = pneg %p1724
      $region150: #{multi_layer_recurrent_gn.1} parent=5 // pred_check_branch
        %1727 = sbr.rel (%p1725) target = $region152
      $region151: #{multi_layer_recurrent_gn.1} parent=5 // pred_region
        %s1728 = ssub.s32 %s38, 2
        // Predicated region
        $region153: #{multi_layer_recurrent_gn.1} parent=151 // pred_check
          %p1729 = pneg %p474
        $region154: #{multi_layer_recurrent_gn.1} parent=151 // pred_check_branch
          %1731 = sbr.rel (%p1729) target = $region156
        $region155: #{multi_layer_recurrent_gn.1} parent=151 // pred_region
          %s1732 = sand.u32 %s44, 1
          %s1733 = scalar_lea.sflag [#allocation4], %s1732
          %s1734 = sand.u32 %s459, 1
          %s1735 = smul.addr %s1734, 16
          %s1736 = scalar_lea.vmem [#allocation21], %s1735
          %1738 = dma.done %s1733, 256
        $region156: #{multi_layer_recurrent_gn.1} parent=151 // pred_fallthru
          _
        // Predicated region
        $region157: #{multi_layer_recurrent_gn.1} parent=151 // pred_check
          %p1739 = pneg %p500
        $region158: #{multi_layer_recurrent_gn.1} parent=151 // pred_check_branch
          %1741 = sbr.rel (%p1739) target = $region160
        $region159: #{multi_layer_recurrent_gn.1} parent=151 // pred_region
          %s1742 = sand.u32 %s44, 1
          %s1743 = scalar_lea.sflag [#allocation4], %s1742
          %s1744 = sand.u32 %s485, 1
          %s1745 = smul.addr %s1744, 32
          %s1746 = scalar_lea.vmem [#allocation22], %s1745
          %1748 = dma.done %s1743, 512
        $region160: #{multi_layer_recurrent_gn.1} parent=151 // pred_fallthru
          _
      $region152: #{multi_layer_recurrent_gn.1} parent=5 // pred_fallthru
        _
    $region6: #{multi_layer_recurrent_gn.1} parent=1 // loop_footer
      %s42 = sadd.s32 1, %s38
    $region7: #{multi_layer_recurrent_gn.1} parent=1 // loop_footer_branch
      %37 = sbr.rel target = $region3
    $region8: #{multi_layer_recurrent_gn.1} parent=1 // loop_exit
      _
    %1749 = vsyncpa [#allocation3], 1
    %s1750 = scalar_lea.sflag [#allocation3], 1
    %1751 = vsyncpa %s1750, 1
    %1752 = vsyncpa [#allocation6], 1
    %1753 = vsyncpa [#allocation11], 1
    %s1754 = scalar_lea.sflag [#allocation11], 1
    %1755 = vsyncpa %s1754, 1
    %1756 = vsyncpa [#allocation14], 1
    %s1757 = scalar_lea.sflag [#allocation14], 1
    %1758 = vsyncpa %s1757, 1
    %1759 = vsyncpa [#allocation17], 1
    %s1760 = scalar_lea.sflag [#allocation17], 1
    %1761 = vsyncpa %s1760, 1
    %1762 = vsyncpa [#allocation4], 1
    %s1763 = scalar_lea.sflag [#allocation4], 1
    %1764 = vsyncpa %s1763, 1
    %1765 = vsyncpa [#allocation20], 1

</llo_original>
